<compile_context>
chip_gen: v7x
topology: tpu7x:2x2x1
jax: 0.10.0
libtpu: 0.0.40
codegen_flags: <defaults>
</compile_context>

<pallas_src>
import math
import jax
import jax.numpy as jnp
from jax.experimental import pallas as pl
from jax.experimental.pallas import tpu as pltpu

# ----------------------------- small config -----------------------------
B, N, K = 2, 8, 3            # batch, num_nodes, num_children
C = 32                       # in_channels == out_channels (residual sum requires it)
NUM_LAYERS = 2
LN_EPS = 1e-5
LEAKY_SLOPE = 0.01
OUT_SUB, OUT_LANE = 8, 128   # padded output tile -> single unmasked full-tile store
assert C % 2 == 0, "the number of in channels must be even"
assert B <= OUT_SUB and C <= OUT_LANE
assert 3 * NUM_LAYERS + 3 <= C   # constants page fits inside one [C, C] weight page


# ----------------------------- plain-JAX glue -----------------------------
def compute_eta(children):
    """children: float [B, N, K] -> eta stacked [B, N, K+1, 3] (t, l, r)."""
    b, n, k = children.shape
    eta_t = jnp.concatenate(
        [jnp.ones((b, n, 1), jnp.float32), jnp.zeros((b, n, k), jnp.float32)], axis=2)
    num_sib = jnp.broadcast_to(
        jnp.count_nonzero(children, axis=2).astype(jnp.float32)[..., None],
        (b, n, k + 1))
    mask = jnp.concatenate(
        [jnp.zeros((b, n, 1), jnp.float32), jnp.minimum(children, 1.0)], axis=2)
    child_idx = jnp.broadcast_to(
        jnp.arange(-1, k, dtype=jnp.float32), (b, n, k + 1)) * mask
    singles = jnp.concatenate(
        [jnp.zeros((b, n, 1), jnp.float32),
         jnp.full((b, n, 1), 0.5, jnp.float32),
         jnp.zeros((b, n, k - 1), jnp.float32)], axis=2)
    # num_sib == 0 would make (num_sib - 1) == -1; child_idx is already masked to 0
    # there, and num_sib == 1 is selected away below -- guard the divisor anyway.
    denom = jnp.where(num_sib <= 1.0, 1.0, num_sib - 1.0)
    eta_r = jnp.where(num_sib == 1.0, singles, (1.0 - eta_t) * child_idx / denom)
    eta_l = mask * (1.0 - eta_t) * (1.0 - eta_r)
    return jnp.stack([eta_t, eta_l, eta_r], axis=-1)       # [B, N, K+1, 3]


def get_children_embedding(parent, children_index):
    """gather_nd equivalent (reference path only): [B,N,C],[B,N,K] -> [B,N,K,C]."""
    b, _, c = parent.shape
    lookup = jnp.concatenate(
        [jnp.zeros((b, 1, c), parent.dtype), parent[:, 1:]], axis=1)   # index 0 -> zero vec
    idx = children_index.astype(jnp.int32)
    return jax.vmap(lambda lut, ix: lut[ix])(lookup, idx)


def build_gather_matrix(children_index, eta):
    """Fold (children gather + eta_l/eta_r weighting + sum over children) into ONE
    stacked block-diagonal matrix G = [G_l; G_r] ([2M, M]) so the kernel computes
    both child aggregates with a single MXU matmul per layer.

    TODO(synk): the data-dependent index->matrix construction stays in plain JAX
    (no rectangular BlockSpec form); it is per-call index preprocessing.
    TODO(synk): for large B*N (esp. v7x 64MiB VMEM) switch to per-batch [B,N,N]
    block matrices + a "parallel" batch grid axis instead of dense [2M, M].
    """
    b, n, k = children_index.shape
    eta_l = eta[:, :, 1:, 1]                                  # [B, N, K]
    eta_r = eta[:, :, 1:, 2]
    idx = children_index.astype(jnp.int32)
    onehot = jax.nn.one_hot(idx, n, dtype=jnp.float32)        # [B, N, K, N]
    onehot = onehot * (idx > 0).astype(jnp.float32)[..., None]  # index 0 -> zero vector
    gl_b = jnp.einsum('bnk,bnkj->bnj', eta_l, onehot)         # [B, N, N]
    gr_b = jnp.einsum('bnk,bnkj->bnj', eta_r, onehot)
    eye_b = jnp.eye(b, dtype=jnp.float32)                     # block-diagonal embed
    gl = (eye_b[:, None, :, None] * gl_b[:, :, None, :]).reshape(b * n, b * n)
    gr = (eye_b[:, None, :, None] * gr_b[:, :, None, :]).reshape(b * n, b * n)
    return jnp.concatenate([gl, gr], axis=0)                  # [2M, M]


def build_attention_selectors(b, n, gate_sig):
    """Pack the attention-epilogue selector matrices (pack time, parameter +
    shape dependent only).  Rows (all with M = b*n columns):
      root_bcast [M]   : row i picks the root row of i's batch (q broadcast)
      g*root_sel [8]   : output row bb picks (and pre-scales by g) the root of bb
      seg_den    [8]   : per-batch segment sum for the softmax denominator
                         (rows >= b clamped to the last batch -> never all-zero)
      (1-g)*seg  [8]   : per-batch segment sum for the softmax numerator
    """
    m = b * n
    rows = jnp.arange(m)
    batch_of = rows // n                                                    # [M]
    root_bcast = jax.nn.one_hot(batch_of * n, m, dtype=jnp.float32)         # [M, M]
    out_rows = jnp.arange(OUT_SUB)
    valid = (out_rows < b).astype(jnp.float32)[:, None]                     # [8, 1]
    root_sel = jax.nn.one_hot(jnp.minimum(out_rows, b - 1) * n, m,
                              dtype=jnp.float32) * valid                    # [8, M]
    seg = (batch_of[None, :] == out_rows[:, None]).astype(jnp.float32)      # [8, M]
    seg_den = (batch_of[None, :] ==
               jnp.minimum(out_rows, b - 1)[:, None]).astype(jnp.float32)   # [8, M]
    return jnp.concatenate(
        [root_bcast, gate_sig * root_sel, seg_den, (1.0 - gate_sig) * seg], axis=0)


# ----------------------------- fused Pallas kernel -----------------------------
def make_fused_kernel(b, n, num_layers, c):
    m = b * n
    f32 = jnp.float32
    bf16 = jnp.bfloat16
    inv_c = 1.0 / c

    def kernel(x0_ref, sel_ref, w_ref, o_ref):
        x0 = x0_ref[...]                               # [M, C] f32
        sel = sel_ref[...]                             # [3M+24, M] f32 (8-aligned slices)
        glr = sel[0:2 * m, :].astype(bf16)             # [2M, M]  (G_l over G_r)
        root_bcast = sel[2 * m:3 * m, :]               # [M, M]
        root_sel_g = sel[3 * m:3 * m + 8, :]           # [8, M]  (* g, pack-time)
        seg_den = sel[3 * m + 8:3 * m + 16, :]         # [8, M]
        seg_agg = sel[3 * m + 16:3 * m + 24, :]        # [8, M]  (* (1-g), pack-time)

        consts = w_ref[3 * num_layers + 3].astype(f32)  # constants page [C, C]

        summed = x0                                    # residual sum (kept in f32)
        cur = x0
        for i in range(num_layers):                    # small static unroll
            # children gather + eta weighting + sum over children: ONE bf16 matmul
            xlr = jnp.dot(glr, cur.astype(bf16), preferred_element_type=f32)   # [2M, C]
            xl = xlr[0:m, :]
            xr = xlr[m:2 * m, :]
            # eta_t == [1,0,...,0]  =>  x_t is exactly the residual sum.
            # Three accumulating bf16 matmuls -- no lane-axis concat.
            res = jnp.dot(summed.astype(bf16), w_ref[3 * i + 0], preferred_element_type=f32)
            res = res + jnp.dot(xl.astype(bf16), w_ref[3 * i + 1], preferred_element_type=f32)
            res = res + jnp.dot(xr.astype(bf16), w_ref[3 * i + 2], preferred_element_type=f32)
            res = res + consts[3 * i + 0:3 * i + 1, :]                         # + bias
            # LayerNorm (eps=1e-5, affine): single fused pass -- sum and
            # sum-of-squares are independent reductions.
            s1 = jnp.sum(res, axis=-1, keepdims=True)
            s2 = jnp.sum(res * res, axis=-1, keepdims=True)
            mean = s1 * inv_c
            var = s2 * inv_c - mean * mean
            normed = (res - mean) * jax.lax.rsqrt(var + LN_EPS)
            normed = normed * consts[3 * i + 1:3 * i + 2, :] + consts[3 * i + 2:3 * i + 3, :]
            # LeakyReLU(0.01); dropout is eval-mode identity.
            cur = jnp.where(normed >= 0, normed, LEAKY_SLOPE * normed)
            summed = summed + cur

        # -------- attention aggregation, vectorized over all B*N rows --------
        q0 = 3 * num_layers
        cur_b = cur.astype(bf16)
        q_all = jnp.dot(cur_b, w_ref[q0 + 0], preferred_element_type=f32) + consts[q0 + 0:q0 + 1, :]
        k_all = jnp.dot(cur_b, w_ref[q0 + 1], preferred_element_type=f32) + consts[q0 + 1:q0 + 2, :]
        v_all = jnp.dot(cur_b, w_ref[q0 + 2], preferred_element_type=f32) + consts[q0 + 2:q0 + 3, :]

        # broadcast each batch's root query to its rows with one (exact f32) matmul
        q_b = jnp.dot(root_bcast, q_all, preferred_element_type=f32)          # [M, C]
        logits = jnp.sum(q_b * k_all, axis=-1, keepdims=True)                 # [M, 1] f32
        row = jax.lax.broadcasted_iota(jnp.int32, (m, 1), 0)                  # built once
        logits = jnp.where(row % n == 0, jnp.float32(-1e30), logits)          # exclude roots
        # Global max = identical shift for every row, so each per-batch softmax is
        # unchanged; avoids a per-batch segment max (stable at these logit ranges).
        mx = jnp.max(logits)
        e = jnp.exp(logits - mx)                                              # roots -> 0
        wv = e * v_all                                                        # [M, C]
        e_full = jnp.broadcast_to(e, (m, c))                                  # [M, C]

        den8 = jnp.dot(seg_den, e_full, preferred_element_type=f32)           # [8, C]
        num8 = jnp.dot(seg_agg, wv, preferred_element_type=f32)               # [8, C] (* (1-g))
        root8 = jnp.dot(root_sel_g, cur, preferred_element_type=f32)          # [8, C] (* g)
        res8 = root8 + num8 * pl.reciprocal(den8, approx=True)                # [8, C]

        # pad [8, C] -> full (8, 128) tile through the (idle) MXU so the final
        # store is a single unmasked full-tile store; wrapper slices [:B, :C].
        pad_eye = (jax.lax.broadcasted_iota(jnp.int32, (c, OUT_LANE), 0) ==
                   jax.lax.broadcasted_iota(jnp.int32, (c, OUT_LANE), 1)).astype(f32)
        o_ref[...] = jnp.dot(res8, pad_eye, preferred_element_type=f32)

    return kernel


def tbcnn_forward_pallas(parent, children_index, packed):
    b, n, c = parent.shape
    m = b * n
    eta = compute_eta(children_index.astype(jnp.float32))          # [B, N, K+1, 3]
    glr = build_gather_matrix(children_index, eta)                 # [2M, M]
    sel = jnp.concatenate([glr, packed['sel_const']], axis=0)      # [3M+24, M] f32
    x0 = parent.reshape(m, c).astype(jnp.float32)
    kernel = make_fused_kernel(b, n, NUM_LAYERS, c)
    # Whole working set is a few KiB -> everything VMEM-resident, no grid, no
    # tiling, three input streams, one full-tile output store.
    # TODO(synk): when invoked for many trees per step, add a leading "parallel"
    # grid axis over instances (v7x: shards across the two TensorCores) instead
    # of one launch per call.
    out = pl.pallas_call(
        kernel,
        out_shape=jax.ShapeDtypeStruct((OUT_SUB, OUT_LANE), jnp.float32),
        in_specs=[pl.BlockSpec(memory_space=pltpu.MemorySpace.VMEM)] * 3,
        out_specs=pl.BlockSpec(memory_space=pltpu.MemorySpace.VMEM),
    )(x0, sel, packed['wslab'])
    return out[:b, :c]


# ----------------------------- pure-JAX reference -----------------------------
def ref_forward(parent, children_index, p):
    eta = compute_eta(children_index.astype(jnp.float32))
    ch_emb = get_children_embedding(parent, children_index)
    summed = parent
    cur = parent
    for i in range(NUM_LAYERS):
        tree = jnp.concatenate([summed[:, :, None, :], ch_emb], axis=2)
        w = jnp.stack([p['w_t'][i], p['w_l'][i], p['w_r'][i]], axis=0)   # [3, C, C]
        res = jnp.einsum('bnsc,bnsk,kcd->bnd', tree, eta, w) + p['bias'][i]
        mean = jnp.mean(res, axis=-1, keepdims=True)
        var = jnp.mean((res - mean) ** 2, axis=-1, keepdims=True)
        res = (res - mean) * jax.lax.rsqrt(var + LN_EPS) * p['ln_gamma'][i] + p['ln_beta'][i]
        cur = jnp.where(res >= 0, res, LEAKY_SLOPE * res)
        ch_emb = get_children_embedding(cur, children_index)
        summed = summed + cur
    root = cur[:, 0]
    children = cur[:, 1:]
    q = root @ p['wq'].T + p['bq']
    k = children @ p['wk'].T + p['bk']
    v = children @ p['wv'].T + p['bv']
    logits = jnp.einsum('ij,ikj->ik', q, k)
    scores = jax.nn.softmax(logits, axis=1)
    agg = jnp.einsum('ik,ikj->ij', scores, v)
    g = jax.nn.sigmoid(p['gate'])
    return g * root + (1.0 - g) * agg


# ----------------------------- parameter init / packing -----------------------------
def init_params(key):
    ks = jax.random.split(key, 10)
    xav = math.sqrt(2.0 / (C + C))        # xavier_normal std for square weights
    lin = 1.0 / math.sqrt(C)
    p = {
        'w_t': [jax.random.normal(jax.random.fold_in(ks[0], i), (C, C)) * xav
                for i in range(NUM_LAYERS)],
        'w_l': [jax.random.normal(jax.random.fold_in(ks[1], i), (C, C)) * xav
                for i in range(NUM_LAYERS)],
        'w_r': [jax.random.normal(jax.random.fold_in(ks[2], i), (C, C)) * xav
                for i in range(NUM_LAYERS)],
        'bias': [jnp.zeros((C,), jnp.float32) for _ in range(NUM_LAYERS)],
        'ln_gamma': [jnp.ones((C,), jnp.float32) for _ in range(NUM_LAYERS)],
        'ln_beta': [jnp.zeros((C,), jnp.float32) for _ in range(NUM_LAYERS)],
        'wq': jax.random.normal(ks[3], (C, C)) * lin,      # torch Linear weight [out, in]
        'wk': jax.random.normal(ks[4], (C, C)) * lin,
        'wv': jax.random.normal(ks[5], (C, C)) * lin,
        'bq': jax.random.normal(ks[6], (C,)) * lin,
        'bk': jax.random.normal(ks[7], (C,)) * lin,
        'bv': jax.random.normal(ks[8], (C,)) * lin,
        'gate': jnp.float32(0.0),
    }
    return p


def pack_params(p):
    """One-time packing:
      wslab [3L+4, C, C] bf16 : per-layer w_t/w_l/w_r pages, wq^T/wk^T/wv^T pages,
                                and one constants page (bias/gamma/beta rows, bq/bk/bv rows).
      sel_const               : attention selector matrices with sigmoid(gate) folded in.
    """
    l = NUM_LAYERS
    pages = []
    for i in range(l):
        pages += [p['w_t'][i], p['w_l'][i], p['w_r'][i]]
    pages += [p['wq'].T, p['wk'].T, p['wv'].T]           # pre-transposed (no .T in kernel)
    const_rows = []
    for i in range(l):
        const_rows += [p['bias'][i], p['ln_gamma'][i], p['ln_beta'][i]]
    const_rows += [p['bq'], p['bk'], p['bv']]
    consts_page = jnp.zeros((C, C), jnp.float32).at[:len(const_rows)].set(
        jnp.stack(const_rows, axis=0))
    pages.append(consts_page)
    wslab = jnp.stack(pages, axis=0).astype(jnp.bfloat16)          # [3L+4, C, C]
    g = jax.nn.sigmoid(jnp.asarray(p['gate'], jnp.float32))        # folded at pack time
    sel_const = build_attention_selectors(B, N, g)                 # [M+24, M] f32
    return dict(wslab=wslab, sel_const=sel_const)


if __name__ == "__main__":
    key = jax.random.PRNGKey(0)
    k_x, k_idx = jax.random.split(key)
    parent_node_embedding = jax.random.normal(k_x, (B, N, C), jnp.float32)
    children_index = jax.random.randint(k_idx, (B, N, K), 0, N).astype(jnp.int32)

    params = init_params(jax.random.PRNGKey(42))
    packed = pack_params(params)

    fwd = jax.jit(tbcnn_forward_pallas)
    out = jax.block_until_ready(fwd(parent_node_embedding, children_index, packed))
    assert out.shape == (B, C)

    ref = ref_forward(parent_node_embedding, children_index, params)
    max_err = float(jnp.max(jnp.abs(out - ref)))
    # bf16 MXU operands (per perf review) introduce ~1e-3..1e-2 rounding vs the
    # all-f32 reference; 5e-2 keeps comfortable headroom while still catching
    # any real semantic error.
    assert max_err < 5e-2, f"mismatch vs reference, max abs err = {max_err}"

    print("KERNEL_OK")
</pallas_src>

<mosaic_0001>
module attributes {stable_mosaic.version = 11 : i64} {
  func.func @kernel(%arg0: memref<16x32xf32, #tpu.memory_space<vmem>>, %arg1: memref<72x16xf32, #tpu.memory_space<vmem>>, %arg2: memref<10x32x32xbf16, #tpu.memory_space<vmem>>, %arg3: memref<8x128xf32, #tpu.memory_space<vmem>>) attributes {dimension_semantics = [], scalar_prefetch = 0 : i64, scratch_operands = 0 : i64, tpu.core_type = #tpu.core_type<tc>} {
    %c0 = arith.constant 0 : index
    %c0_0 = arith.constant 0 : index
    %0 = vector.load %arg0[%c0, %c0_0] : memref<16x32xf32, #tpu.memory_space<vmem>>, vector<16x32xf32>
    %c0_1 = arith.constant 0 : index
    %c0_2 = arith.constant 0 : index
    %1 = vector.load %arg1[%c0_1, %c0_2] : memref<72x16xf32, #tpu.memory_space<vmem>>, vector<72x16xf32>
    %2 = vector.extract_strided_slice %1 {offsets = [0, 0], sizes = [32, 16], strides = [1, 1]} : vector<72x16xf32> to vector<32x16xf32>
    %3 = arith.truncf %2 : vector<32x16xf32> to vector<32x16xbf16>
    %4 = vector.extract_strided_slice %1 {offsets = [32, 0], sizes = [16, 16], strides = [1, 1]} : vector<72x16xf32> to vector<16x16xf32>
    %5 = vector.extract_strided_slice %1 {offsets = [48, 0], sizes = [8, 16], strides = [1, 1]} : vector<72x16xf32> to vector<8x16xf32>
    %6 = vector.extract_strided_slice %1 {offsets = [56, 0], sizes = [8, 16], strides = [1, 1]} : vector<72x16xf32> to vector<8x16xf32>
    %7 = vector.extract_strided_slice %1 {offsets = [64, 0], sizes = [8, 16], strides = [1, 1]} : vector<72x16xf32> to vector<8x16xf32>
    %c9 = arith.constant 9 : index
    %c0_3 = arith.constant 0 : index
    %c0_4 = arith.constant 0 : index
    %8 = vector.load %arg2[%c9, %c0_3, %c0_4] : memref<10x32x32xbf16, #tpu.memory_space<vmem>>, vector<1x32x32xbf16>
    %9 = vector.shape_cast %8 : vector<1x32x32xbf16> to vector<32x32xbf16>
    %10 = arith.extf %9 : vector<32x32xbf16> to vector<32x32xf32>
    %11 = arith.truncf %0 : vector<16x32xf32> to vector<16x32xbf16>
    %cst = arith.constant dense<0.000000e+00> : vector<32x32xf32>
    %12 = tpu.matmul %3, %11, %cst {dimension_numbers = #tpu.dot_dimension_numbers<[1], [0], [0], [1], [0, 0, 1, 1], [], []>} : vector<32x16xbf16>, vector<16x32xbf16>, vector<32x32xf32> -> vector<32x32xf32>
    %13 = vector.extract_strided_slice %12 {offsets = [0, 0], sizes = [16, 32], strides = [1, 1]} : vector<32x32xf32> to vector<16x32xf32>
    %14 = vector.extract_strided_slice %12 {offsets = [16, 0], sizes = [16, 32], strides = [1, 1]} : vector<32x32xf32> to vector<16x32xf32>
    %15 = arith.truncf %0 : vector<16x32xf32> to vector<16x32xbf16>
    %c0_5 = arith.constant 0 : index
    %c0_6 = arith.constant 0 : index
    %c0_7 = arith.constant 0 : index
    %16 = vector.load %arg2[%c0_5, %c0_6, %c0_7] : memref<10x32x32xbf16, #tpu.memory_space<vmem>>, vector<1x32x32xbf16>
    %17 = vector.shape_cast %16 : vector<1x32x32xbf16> to vector<32x32xbf16>
    %cst_8 = arith.constant dense<0.000000e+00> : vector<16x32xf32>
    %18 = tpu.matmul %15, %17, %cst_8 {dimension_numbers = #tpu.dot_dimension_numbers<[1], [0], [0], [1], [0, 0, 1, 1], [], []>} : vector<16x32xbf16>, vector<32x32xbf16>, vector<16x32xf32> -> vector<16x32xf32>
    %19 = arith.truncf %13 : vector<16x32xf32> to vector<16x32xbf16>
    %c1 = arith.constant 1 : index
    %c0_9 = arith.constant 0 : index
    %c0_10 = arith.constant 0 : index
    %20 = vector.load %arg2[%c1, %c0_9, %c0_10] : memref<10x32x32xbf16, #tpu.memory_space<vmem>>, vector<1x32x32xbf16>
    %21 = vector.shape_cast %20 : vector<1x32x32xbf16> to vector<32x32xbf16>
    %cst_11 = arith.constant dense<0.000000e+00> : vector<16x32xf32>
    %22 = tpu.matmul %19, %21, %cst_11 {dimension_numbers = #tpu.dot_dimension_numbers<[1], [0], [0], [1], [0, 0, 1, 1], [], []>} : vector<16x32xbf16>, vector<32x32xbf16>, vector<16x32xf32> -> vector<16x32xf32>
    %23 = arith.addf %18, %22 : vector<16x32xf32>
    %24 = arith.truncf %14 : vector<16x32xf32> to vector<16x32xbf16>
    %c2 = arith.constant 2 : index
    %c0_12 = arith.constant 0 : index
    %c0_13 = arith.constant 0 : index
    %25 = vector.load %arg2[%c2, %c0_12, %c0_13] : memref<10x32x32xbf16, #tpu.memory_space<vmem>>, vector<1x32x32xbf16>
    %26 = vector.shape_cast %25 : vector<1x32x32xbf16> to vector<32x32xbf16>
    %cst_14 = arith.constant dense<0.000000e+00> : vector<16x32xf32>
    %27 = tpu.matmul %24, %26, %cst_14 {dimension_numbers = #tpu.dot_dimension_numbers<[1], [0], [0], [1], [0, 0, 1, 1], [], []>} : vector<16x32xbf16>, vector<32x32xbf16>, vector<16x32xf32> -> vector<16x32xf32>
    %28 = arith.addf %23, %27 : vector<16x32xf32>
    %29 = vector.extract_strided_slice %10 {offsets = [0, 0], sizes = [1, 32], strides = [1, 1]} : vector<32x32xf32> to vector<1x32xf32>
    %30 = vector.broadcast %29 : vector<1x32xf32> to vector<16x32xf32>
    %31 = arith.addf %28, %30 : vector<16x32xf32>
    %cst_15 = arith.constant dense<0.000000e+00> : vector<16xf32>
    %32 = vector.multi_reduction <add>, %31, %cst_15 [1] : vector<16x32xf32> to vector<16xf32>
    %33 = vector.shape_cast %32 : vector<16xf32> to vector<16x1xf32>
    %34 = arith.mulf %31, %31 : vector<16x32xf32>
    %cst_16 = arith.constant dense<0.000000e+00> : vector<16xf32>
    %35 = vector.multi_reduction <add>, %34, %cst_16 [1] : vector<16x32xf32> to vector<16xf32>
    %36 = vector.shape_cast %35 : vector<16xf32> to vector<16x1xf32>
    %cst_17 = arith.constant 3.125000e-02 : f32
    %37 = vector.broadcast %cst_17 : f32 to vector<16x1xf32>
    %38 = arith.mulf %33, %37 : vector<16x1xf32>
    %cst_18 = arith.constant 3.125000e-02 : f32
    %39 = vector.broadcast %cst_18 : f32 to vector<16x1xf32>
    %40 = arith.mulf %36, %39 : vector<16x1xf32>
    %41 = arith.mulf %38, %38 : vector<16x1xf32>
    %42 = arith.subf %40, %41 : vector<16x1xf32>
    %43 = vector.broadcast %38 : vector<16x1xf32> to vector<16x32xf32>
    %44 = arith.subf %31, %43 : vector<16x32xf32>
    %cst_19 = arith.constant 9.99999974E-6 : f32
    %45 = vector.broadcast %cst_19 : f32 to vector<16x1xf32>
    %46 = arith.addf %42, %45 : vector<16x1xf32>
    %47 = math.rsqrt %46 : vector<16x1xf32>
    %48 = vector.broadcast %47 : vector<16x1xf32> to vector<16x32xf32>
    %49 = arith.mulf %44, %48 : vector<16x32xf32>
    %50 = vector.extract_strided_slice %10 {offsets = [1, 0], sizes = [1, 32], strides = [1, 1]} : vector<32x32xf32> to vector<1x32xf32>
    %51 = vector.broadcast %50 : vector<1x32xf32> to vector<16x32xf32>
    %52 = arith.mulf %49, %51 : vector<16x32xf32>
    %53 = vector.extract_strided_slice %10 {offsets = [2, 0], sizes = [1, 32], strides = [1, 1]} : vector<32x32xf32> to vector<1x32xf32>
    %54 = vector.broadcast %53 : vector<1x32xf32> to vector<16x32xf32>
    %55 = arith.addf %52, %54 : vector<16x32xf32>
    %cst_20 = arith.constant 0.000000e+00 : f32
    %56 = vector.broadcast %cst_20 : f32 to vector<16x32xf32>
    %57 = arith.cmpf oge, %55, %56 : vector<16x32xf32>
    %cst_21 = arith.constant 0.00999999977 : f32
    %58 = vector.broadcast %cst_21 : f32 to vector<16x32xf32>
    %59 = arith.mulf %58, %55 : vector<16x32xf32>
    %60 = arith.select %57, %55, %59 : vector<16x32xi1>, vector<16x32xf32>
    %61 = arith.addf %0, %60 : vector<16x32xf32>
    %62 = arith.truncf %60 : vector<16x32xf32> to vector<16x32xbf16>
    %cst_22 = arith.constant dense<0.000000e+00> : vector<32x32xf32>
    %63 = tpu.matmul %3, %62, %cst_22 {dimension_numbers = #tpu.dot_dimension_numbers<[1], [0], [0], [1], [0, 0, 1, 1], [], []>} : vector<32x16xbf16>, vector<16x32xbf16>, vector<32x32xf32> -> vector<32x32xf32>
    %64 = vector.extract_strided_slice %63 {offsets = [0, 0], sizes = [16, 32], strides = [1, 1]} : vector<32x32xf32> to vector<16x32xf32>
    %65 = vector.extract_strided_slice %63 {offsets = [16, 0], sizes = [16, 32], strides = [1, 1]} : vector<32x32xf32> to vector<16x32xf32>
    %66 = arith.truncf %61 : vector<16x32xf32> to vector<16x32xbf16>
    %c3 = arith.constant 3 : index
    %c0_23 = arith.constant 0 : index
    %c0_24 = arith.constant 0 : index
    %67 = vector.load %arg2[%c3, %c0_23, %c0_24] : memref<10x32x32xbf16, #tpu.memory_space<vmem>>, vector<1x32x32xbf16>
    %68 = vector.shape_cast %67 : vector<1x32x32xbf16> to vector<32x32xbf16>
    %cst_25 = arith.constant dense<0.000000e+00> : vector<16x32xf32>
    %69 = tpu.matmul %66, %68, %cst_25 {dimension_numbers = #tpu.dot_dimension_numbers<[1], [0], [0], [1], [0, 0, 1, 1], [], []>} : vector<16x32xbf16>, vector<32x32xbf16>, vector<16x32xf32> -> vector<16x32xf32>
    %70 = arith.truncf %64 : vector<16x32xf32> to vector<16x32xbf16>
    %c4 = arith.constant 4 : index
    %c0_26 = arith.constant 0 : index
    %c0_27 = arith.constant 0 : index
    %71 = vector.load %arg2[%c4, %c0_26, %c0_27] : memref<10x32x32xbf16, #tpu.memory_space<vmem>>, vector<1x32x32xbf16>
    %72 = vector.shape_cast %71 : vector<1x32x32xbf16> to vector<32x32xbf16>
    %cst_28 = arith.constant dense<0.000000e+00> : vector<16x32xf32>
    %73 = tpu.matmul %70, %72, %cst_28 {dimension_numbers = #tpu.dot_dimension_numbers<[1], [0], [0], [1], [0, 0, 1, 1], [], []>} : vector<16x32xbf16>, vector<32x32xbf16>, vector<16x32xf32> -> vector<16x32xf32>
    %74 = arith.addf %69, %73 : vector<16x32xf32>
    %75 = arith.truncf %65 : vector<16x32xf32> to vector<16x32xbf16>
    %c5 = arith.constant 5 : index
    %c0_29 = arith.constant 0 : index
    %c0_30 = arith.constant 0 : index
    %76 = vector.load %arg2[%c5, %c0_29, %c0_30] : memref<10x32x32xbf16, #tpu.memory_space<vmem>>, vector<1x32x32xbf16>
    %77 = vector.shape_cast %76 : vector<1x32x32xbf16> to vector<32x32xbf16>
    %cst_31 = arith.constant dense<0.000000e+00> : vector<16x32xf32>
    %78 = tpu.matmul %75, %77, %cst_31 {dimension_numbers = #tpu.dot_dimension_numbers<[1], [0], [0], [1], [0, 0, 1, 1], [], []>} : vector<16x32xbf16>, vector<32x32xbf16>, vector<16x32xf32> -> vector<16x32xf32>
    %79 = arith.addf %74, %78 : vector<16x32xf32>
    %80 = vector.extract_strided_slice %10 {offsets = [3, 0], sizes = [1, 32], strides = [1, 1]} : vector<32x32xf32> to vector<1x32xf32>
    %81 = vector.broadcast %80 : vector<1x32xf32> to vector<16x32xf32>
    %82 = arith.addf %79, %81 : vector<16x32xf32>
    %cst_32 = arith.constant dense<0.000000e+00> : vector<16xf32>
    %83 = vector.multi_reduction <add>, %82, %cst_32 [1] : vector<16x32xf32> to vector<16xf32>
    %84 = vector.shape_cast %83 : vector<16xf32> to vector<16x1xf32>
    %85 = arith.mulf %82, %82 : vector<16x32xf32>
    %cst_33 = arith.constant dense<0.000000e+00> : vector<16xf32>
    %86 = vector.multi_reduction <add>, %85, %cst_33 [1] : vector<16x32xf32> to vector<16xf32>
    %87 = vector.shape_cast %86 : vector<16xf32> to vector<16x1xf32>
    %cst_34 = arith.constant 3.125000e-02 : f32
    %88 = vector.broadcast %cst_34 : f32 to vector<16x1xf32>
    %89 = arith.mulf %84, %88 : vector<16x1xf32>
    %cst_35 = arith.constant 3.125000e-02 : f32
    %90 = vector.broadcast %cst_35 : f32 to vector<16x1xf32>
    %91 = arith.mulf %87, %90 : vector<16x1xf32>
    %92 = arith.mulf %89, %89 : vector<16x1xf32>
    %93 = arith.subf %91, %92 : vector<16x1xf32>
    %94 = vector.broadcast %89 : vector<16x1xf32> to vector<16x32xf32>
    %95 = arith.subf %82, %94 : vector<16x32xf32>
    %cst_36 = arith.constant 9.99999974E-6 : f32
    %96 = vector.broadcast %cst_36 : f32 to vector<16x1xf32>
    %97 = arith.addf %93, %96 : vector<16x1xf32>
    %98 = math.rsqrt %97 : vector<16x1xf32>
    %99 = vector.broadcast %98 : vector<16x1xf32> to vector<16x32xf32>
    %100 = arith.mulf %95, %99 : vector<16x32xf32>
    %101 = vector.extract_strided_slice %10 {offsets = [4, 0], sizes = [1, 32], strides = [1, 1]} : vector<32x32xf32> to vector<1x32xf32>
    %102 = vector.broadcast %101 : vector<1x32xf32> to vector<16x32xf32>
    %103 = arith.mulf %100, %102 : vector<16x32xf32>
    %104 = vector.extract_strided_slice %10 {offsets = [5, 0], sizes = [1, 32], strides = [1, 1]} : vector<32x32xf32> to vector<1x32xf32>
    %105 = vector.broadcast %104 : vector<1x32xf32> to vector<16x32xf32>
    %106 = arith.addf %103, %105 : vector<16x32xf32>
    %cst_37 = arith.constant 0.000000e+00 : f32
    %107 = vector.broadcast %cst_37 : f32 to vector<16x32xf32>
    %108 = arith.cmpf oge, %106, %107 : vector<16x32xf32>
    %cst_38 = arith.constant 0.00999999977 : f32
    %109 = vector.broadcast %cst_38 : f32 to vector<16x32xf32>
    %110 = arith.mulf %109, %106 : vector<16x32xf32>
    %111 = arith.select %108, %106, %110 : vector<16x32xi1>, vector<16x32xf32>
    %112 = arith.truncf %111 : vector<16x32xf32> to vector<16x32xbf16>
    %c6 = arith.constant 6 : index
    %c0_39 = arith.constant 0 : index
    %c0_40 = arith.constant 0 : index
    %113 = vector.load %arg2[%c6, %c0_39, %c0_40] : memref<10x32x32xbf16, #tpu.memory_space<vmem>>, vector<1x32x32xbf16>
    %114 = vector.shape_cast %113 : vector<1x32x32xbf16> to vector<32x32xbf16>
    %cst_41 = arith.constant dense<0.000000e+00> : vector<16x32xf32>
    %115 = tpu.matmul %112, %114, %cst_41 {dimension_numbers = #tpu.dot_dimension_numbers<[1], [0], [0], [1], [0, 0, 1, 1], [], []>} : vector<16x32xbf16>, vector<32x32xbf16>, vector<16x32xf32> -> vector<16x32xf32>
    %116 = vector.extract_strided_slice %10 {offsets = [6, 0], sizes = [1, 32], strides = [1, 1]} : vector<32x32xf32> to vector<1x32xf32>
    %117 = vector.broadcast %116 : vector<1x32xf32> to vector<16x32xf32>
    %118 = arith.addf %115, %117 : vector<16x32xf32>
    %c7 = arith.constant 7 : index
    %c0_42 = arith.constant 0 : index
    %c0_43 = arith.constant 0 : index
    %119 = vector.load %arg2[%c7, %c0_42, %c0_43] : memref<10x32x32xbf16, #tpu.memory_space<vmem>>, vector<1x32x32xbf16>
    %120 = vector.shape_cast %119 : vector<1x32x32xbf16> to vector<32x32xbf16>
    %cst_44 = arith.constant dense<0.000000e+00> : vector<16x32xf32>
    %121 = tpu.matmul %112, %120, %cst_44 {dimension_numbers = #tpu.dot_dimension_numbers<[1], [0], [0], [1], [0, 0, 1, 1], [], []>} : vector<16x32xbf16>, vector<32x32xbf16>, vector<16x32xf32> -> vector<16x32xf32>
    %122 = vector.extract_strided_slice %10 {offsets = [7, 0], sizes = [1, 32], strides = [1, 1]} : vector<32x32xf32> to vector<1x32xf32>
    %123 = vector.broadcast %122 : vector<1x32xf32> to vector<16x32xf32>
    %124 = arith.addf %121, %123 : vector<16x32xf32>
    %c8 = arith.constant 8 : index
    %c0_45 = arith.constant 0 : index
    %c0_46 = arith.constant 0 : index
    %125 = vector.load %arg2[%c8, %c0_45, %c0_46] : memref<10x32x32xbf16, #tpu.memory_space<vmem>>, vector<1x32x32xbf16>
    %126 = vector.shape_cast %125 : vector<1x32x32xbf16> to vector<32x32xbf16>
    %cst_47 = arith.constant dense<0.000000e+00> : vector<16x32xf32>
    %127 = tpu.matmul %112, %126, %cst_47 {dimension_numbers = #tpu.dot_dimension_numbers<[1], [0], [0], [1], [0, 0, 1, 1], [], []>} : vector<16x32xbf16>, vector<32x32xbf16>, vector<16x32xf32> -> vector<16x32xf32>
    %128 = vector.extract_strided_slice %10 {offsets = [8, 0], sizes = [1, 32], strides = [1, 1]} : vector<32x32xf32> to vector<1x32xf32>
    %129 = vector.broadcast %128 : vector<1x32xf32> to vector<16x32xf32>
    %130 = arith.addf %127, %129 : vector<16x32xf32>
    %cst_48 = arith.constant dense<0.000000e+00> : vector<16x32xf32>
    %131 = tpu.matmul %4, %118, %cst_48 {dimension_numbers = #tpu.dot_dimension_numbers<[1], [0], [0], [1], [0, 0, 1, 1], [], []>} : vector<16x16xf32>, vector<16x32xf32>, vector<16x32xf32> -> vector<16x32xf32>
    %132 = arith.mulf %131, %124 : vector<16x32xf32>
    %cst_49 = arith.constant dense<0.000000e+00> : vector<16xf32>
    %133 = vector.multi_reduction <add>, %132, %cst_49 [1] : vector<16x32xf32> to vector<16xf32>
    %134 = vector.shape_cast %133 : vector<16xf32> to vector<16x1xf32>
    %135 = tpu.iota {dimensions = array<i32: 0>} : vector<16x1xi32>
    %c8_i32 = arith.constant 8 : i32
    %c0_i32 = arith.constant 0 : i32
    %136 = arith.cmpi eq, %c8_i32, %c0_i32 : i32
    %c1_i32 = arith.constant 1 : i32
    %137 = arith.select %136, %c1_i32, %c8_i32 : i32
    %138 = vector.broadcast %137 : i32 to vector<16x1xi32>
    %139 = arith.remsi %135, %138 : vector<16x1xi32>
    %c0_i32_50 = arith.constant 0 : i32
    %140 = vector.broadcast %c0_i32_50 : i32 to vector<16x1xi32>
    %141 = arith.cmpi ne, %139, %140 : vector<16x1xi32>
    %c0_i32_51 = arith.constant 0 : i32
    %142 = vector.broadcast %c0_i32_51 : i32 to vector<16x1xi32>
    %143 = arith.cmpi slt, %139, %142 : vector<16x1xi32>
    %c0_i32_52 = arith.constant 0 : i32
    %144 = arith.cmpi slt, %137, %c0_i32_52 : i32
    %145 = vector.broadcast %144 : i1 to vector<16x1xi1>
    %146 = vector.broadcast %145 : vector<16x1xi1> to vector<16x1xi1>
    %147 = arith.xori %143, %146 : vector<16x1xi1>
    %148 = arith.andi %147, %141 : vector<16x1xi1>
    %149 = vector.broadcast %137 : i32 to vector<16x1xi32>
    %150 = arith.addi %139, %149 : vector<16x1xi32>
    %151 = arith.select %148, %150, %139 : vector<16x1xi1>, vector<16x1xi32>
    %c0_i32_53 = arith.constant 0 : i32
    %152 = vector.broadcast %c0_i32_53 : i32 to vector<16x1xi32>
    %153 = arith.cmpi eq, %151, %152 : vector<16x1xi32>
    %cst_54 = arith.constant -1.000000e+30 : f32
    %154 = vector.broadcast %cst_54 : f32 to vector<16x1xf32>
    %155 = arith.select %153, %154, %134 : vector<16x1xi1>, vector<16x1xf32>
    %156 = vector.shape_cast %155 : vector<16x1xf32> to vector<1x16x1xf32>
    %cst_55 = arith.constant dense<0xFF800000> : vector<1xf32>
    %157 = vector.multi_reduction <maximumf>, %156, %cst_55 [1, 2] : vector<1x16x1xf32> to vector<1xf32>
    %158 = vector.shape_cast %157 : vector<1xf32> to vector<1x1x1xf32>
    %159 = vector.extract %158[0, 0, 0] : f32 from vector<1x1x1xf32>
    %160 = vector.broadcast %159 : f32 to vector<16x1xf32>
    %161 = arith.subf %155, %160 : vector<16x1xf32>
    %162 = math.exp %161 : vector<16x1xf32>
    %163 = vector.broadcast %162 : vector<16x1xf32> to vector<16x32xf32>
    %164 = arith.mulf %163, %130 : vector<16x32xf32>
    %165 = vector.shape_cast %162 : vector<16x1xf32> to vector<16x1xf32>
    %166 = vector.broadcast %165 : vector<16x1xf32> to vector<16x32xf32>
    %cst_56 = arith.constant dense<0.000000e+00> : vector<8x32xf32>
    %167 = tpu.matmul %6, %166, %cst_56 {dimension_numbers = #tpu.dot_dimension_numbers<[1], [0], [0], [1], [0, 0, 1, 1], [], []>} : vector<8x16xf32>, vector<16x32xf32>, vector<8x32xf32> -> vector<8x32xf32>
    %cst_57 = arith.constant dense<0.000000e+00> : vector<8x32xf32>
    %168 = tpu.matmul %7, %164, %cst_57 {dimension_numbers = #tpu.dot_dimension_numbers<[1], [0], [0], [1], [0, 0, 1, 1], [], []>} : vector<8x16xf32>, vector<16x32xf32>, vector<8x32xf32> -> vector<8x32xf32>
    %cst_58 = arith.constant dense<0.000000e+00> : vector<8x32xf32>
    %169 = tpu.matmul %5, %111, %cst_58 {dimension_numbers = #tpu.dot_dimension_numbers<[1], [0], [0], [1], [0, 0, 1, 1], [], []>} : vector<8x16xf32>, vector<16x32xf32>, vector<8x32xf32> -> vector<8x32xf32>
    %170 = tpu.reciprocal %167 {approx = true} : vector<8x32xf32> -> vector<8x32xf32>
    %171 = arith.mulf %168, %170 : vector<8x32xf32>
    %172 = arith.addf %169, %171 : vector<8x32xf32>
    %173 = tpu.iota {dimensions = array<i32: 0>} : vector<32x128xi32>
    %174 = tpu.iota {dimensions = array<i32: 1>} : vector<32x128xi32>
    %175 = arith.cmpi eq, %173, %174 : vector<32x128xi32>
    %176 = arith.extui %175 : vector<32x128xi1> to vector<32x128xi32>
    %177 = arith.sitofp %176 : vector<32x128xi32> to vector<32x128xf32>
    %cst_59 = arith.constant dense<0.000000e+00> : vector<8x128xf32>
    %178 = tpu.matmul %172, %177, %cst_59 {dimension_numbers = #tpu.dot_dimension_numbers<[1], [0], [0], [1], [0, 0, 1, 1], [], []>} : vector<8x32xf32>, vector<32x128xf32>, vector<8x128xf32> -> vector<8x128xf32>
    %c0_60 = arith.constant 0 : index
    %c0_61 = arith.constant 0 : index
    %179 = vector.load %arg3[%c0_60, %c0_61] : memref<8x128xf32, #tpu.memory_space<vmem>>, vector<8x128xf32>
    tpu.vector_store %arg3[%c0_60, %c0_61], %178 {strides = array<i32>} : memref<8x128xf32, #tpu.memory_space<vmem>>, vector<8x128xf32>,
    return
  }
}

</mosaic_0001>

<llo_original>
// kernel: tbcnn_forward_pallas.1
$region0: #{tbcnn_forward_pallas.1}
  #allocation0 [shape = 'u32[]', space=smem, size = 0x4, offset = 0x4, fixed_abs, tag = 'smem constant byte address 0x4 - core index']
  #allocation1 [shape = 'u32[144,128]{1,0:T(1,128)}', space=vmem, size = 0x12000, scoped, tag = 'internal scratch']
  %s0 = inlined_call_operand.vmem [shape: f32[16,32], index: 0, kind: input, shape index: {}]
  %s1 = inlined_call_operand.vmem [shape: f32[72,16], index: 1, kind: input, shape index: {}]
  %s2 = inlined_call_operand.vmem [shape: bf16[10,32,32], index: 2, kind: input, shape index: {}]
  %s3 = inlined_call_operand.vmem [shape: f32[8,128], index: 3, kind: output, shape index: {}]
  %s4 = sld [smem:[#allocation0]]
  $region22: #{tbcnn_forward_pallas.1} parent=0
    _
  %s6 = ssub.s32 1, %s4
  %s7 = scalar_select 0, %s6, %s4
  // Predicated region
  $region2: #{tbcnn_forward_pallas.1} parent=0 // pred_check
    _
  $region3: #{tbcnn_forward_pallas.1} parent=0 // pred_check_branch
    %9 = sbr.rel (0) target = $region5
  $region4: #{tbcnn_forward_pallas.1} parent=0 // pred_region
    _
  $region5: #{tbcnn_forward_pallas.1} parent=0 // pred_fallthru
    _
  // Predicated region
  $region6: #{tbcnn_forward_pallas.1} parent=0 // pred_check
    _
  $region7: #{tbcnn_forward_pallas.1} parent=0 // pred_check_branch
    %11 = sbr.rel (0) target = $region9
  $region8: #{tbcnn_forward_pallas.1} parent=0 // pred_region
    _
  $region9: #{tbcnn_forward_pallas.1} parent=0 // pred_fallthru
    _
  // Predicated region
  $region10: #{tbcnn_forward_pallas.1} parent=0 // pred_check
    _
  $region11: #{tbcnn_forward_pallas.1} parent=0 // pred_check_branch
    %13 = sbr.rel (0) target = $region13
  $region12: #{tbcnn_forward_pallas.1} parent=0 // pred_region
    _
  $region13: #{tbcnn_forward_pallas.1} parent=0 // pred_fallthru
    _
  %v15 = vld [vmem:[%s0] sm:$0xff]
  %v16 = vld [vmem:[%s0 + $0x8] sm:$0xff]
  %v17 = vld [vmem:[%s1] sm:$0xff]
  %v18 = vld [vmem:[%s1 + $0x8] sm:$0xff]
  %v19 = vld [vmem:[%s1 + $0x10] sm:$0xff]
  %v20 = vld [vmem:[%s1 + $0x18] sm:$0xff]
  %v21 = vld [vmem:[%s1 + $0x20] sm:$0xff]
  %v22 = vld [vmem:[%s1 + $0x28] sm:$0xff]
  %v23 = vld [vmem:[%s1 + $0x30] sm:$0xff]
  %v24 = vld [vmem:[%s1 + $0x38] sm:$0xff]
  %v25 = vld [vmem:[%s1 + $0x40] sm:$0xff]
  %v26 = vpack.c.bf16 %v18, %v17
  %v27 = vpack.c.bf16 %v20, %v19
  %s28 = scalar_lea.vmem %s2, 144
  %v29 = vld [vmem:[%s28] sm:$0xf]
  %v30 = vld [vmem:[%s28 + $0x4] sm:$0xf]
  %v31 = vunpack.c.l.bf16 %v29
  %v32 = vunpack.c.l.bf16 %v30
  %v33 = vpack.c.bf16 %v16, %v15
  %vm34 = vcmask 130048
  %v36 = vsel %vm34, %v26, 0
  %v39 = vsel %vm34, %v27, 0
  %41 = vmatprep.subr.bf16.mxu0 0
  %42 = vmatpush1.bf16.msra.mxu0 %v33
  %43 = vmatprep.subr.bf16.mxu0 0
  %44 = vmatpush1.bf16.msra.mxu0 0
  %45 = vmatprep.subr.bf16.mxu0 0
  %46 = vmatpush1.bf16.msra.mxu0 0
  %47 = vmatprep.subr.bf16.mxu0 0
  %48 = vmatpush1.bf16.msra.mxu0 0
  %49 = vmatprep.subr.bf16.mxu0 0
  %50 = vmatpush1.bf16.msra.mxu0 0
  %51 = vmatprep.subr.bf16.mxu0 0
  %52 = vmatpush1.bf16.msra.mxu0 0
  %53 = vmatprep.subr.bf16.mxu0 0
  %54 = vmatpush1.bf16.msra.mxu0 0
  %55 = vmatprep.subr.bf16.mxu0 0
  %56 = vmatpush1.bf16.msra.mxu0 0
  %57 = vmatprep.subr.bf16.mxu0 0
  %58 = vmatpush1.bf16.msra.mxu0 0
  %59 = vmatprep.subr.bf16.mxu0 0
  %60 = vmatpush1.bf16.msra.mxu0 0
  %61 = vmatprep.subr.bf16.mxu0 0
  %62 = vmatpush1.bf16.msra.mxu0 0
  %63 = vmatprep.subr.bf16.mxu0 0
  %64 = vmatpush1.bf16.msra.mxu0 0
  %65 = vmatprep.subr.bf16.mxu0 0
  %66 = vmatpush1.bf16.msra.mxu0 0
  %67 = vmatprep.subr.bf16.mxu0 0
  %68 = vmatpush1.bf16.msra.mxu0 0
  %69 = vmatprep.subr.bf16.mxu0 0
  %70 = vmatpush1.bf16.msra.mxu0 0
  %71 = vmatprep.subr.bf16.mxu0 0
  %72 = vmatpush1.bf16.msra.mxu0 0
  %73 = vmatprep.mubr.bf16.mxu0 0
  %74 = vmatmul.mubr.bf16.gmra.mrb[0].mxu0 %v36
  %v75 = vpop.f32.mrb[0].mxu0
  %v76 = vadd.f32 0.0, %v75
  %v77 = vpop.f32.mrb[0].mxu0
  %v78 = vpop.f32.mrb[0].mxu0
  %v79 = vadd.f32 0.0, %v78
  %v80 = vpop.f32.mrb[0].mxu0
  %81 = vmatprep.mubr.bf16.mxu0 0
  %82 = vmatmul.mubr.bf16.gmra.mrb[0].mxu0 %v39
  %v83 = vpop.f32.mrb[0].mxu0
  %v84 = vadd.f32 0.0, %v83
  %v85 = vpop.f32.mrb[0].mxu0
  %v86 = vpop.f32.mrb[0].mxu0
  %v87 = vadd.f32 0.0, %v86
  %v88 = vpop.f32.mrb[0].mxu0
  %89 = vdwg.mxu0
  %v90 = vld [vmem:[%s2] sm:$0xf]
  %v91 = vld [vmem:[%s2 + $0x4] sm:$0xf]
  %v92 = vld [vmem:[%s2 + $0x8] sm:$0xf]
  %v93 = vld [vmem:[%s2 + $0xc] sm:$0xf]
  %v94 = vpack.c.bf16 %v79, %v76
  %s95 = scalar_lea.vmem %s2, 16
  %v96 = vld [vmem:[%s95] sm:$0xf]
  %v97 = vld [vmem:[%s95 + $0x4] sm:$0xf]
  %v98 = vld [vmem:[%s95 + $0x8] sm:$0xf]
  %v99 = vld [vmem:[%s95 + $0xc] sm:$0xf]
  %v104 = vunpack.c.l.b16 %v96
  %v105 = vunpack.c.l.b16 %v97
  %v106 = vunpack.c.l.b16 %v98
  %v107 = vunpack.c.l.b16 %v99
  %v108 = vpack.c.b16 %v105, %v104
  %v109 = vpack.c.b16 %v107, %v106
  %vm112 = vcmask 261120
  %v114 = vsel %vm112, %v94, 0
  %116 = vmatprep.subr.bf16.mxu0 0
  %117 = vmatpush1.bf16.msra.mxu0 %v108
  %118 = vmatprep.subr.bf16.mxu0 0
  %119 = vmatpush1.bf16.msra.mxu0 %v109
  %120 = vmatprep.subr.bf16.mxu0 0
  %121 = vmatpush1.bf16.msra.mxu0 0
  %122 = vmatprep.subr.bf16.mxu0 0
  %123 = vmatpush1.bf16.msra.mxu0 0
  %124 = vmatprep.subr.bf16.mxu0 0
  %125 = vmatpush1.bf16.msra.mxu0 0
  %126 = vmatprep.subr.bf16.mxu0 0
  %127 = vmatpush1.bf16.msra.mxu0 0
  %128 = vmatprep.subr.bf16.mxu0 0
  %129 = vmatpush1.bf16.msra.mxu0 0
  %130 = vmatprep.subr.bf16.mxu0 0
  %131 = vmatpush1.bf16.msra.mxu0 0
  %132 = vmatprep.subr.bf16.mxu0 0
  %133 = vmatpush1.bf16.msra.mxu0 0
  %134 = vmatprep.subr.bf16.mxu0 0
  %135 = vmatpush1.bf16.msra.mxu0 0
  %136 = vmatprep.subr.bf16.mxu0 0
  %137 = vmatpush1.bf16.msra.mxu0 0
  %138 = vmatprep.subr.bf16.mxu0 0
  %139 = vmatpush1.bf16.msra.mxu0 0
  %140 = vmatprep.subr.bf16.mxu0 0
  %141 = vmatpush1.bf16.msra.mxu0 0
  %142 = vmatprep.subr.bf16.mxu0 0
  %143 = vmatpush1.bf16.msra.mxu0 0
  %144 = vmatprep.subr.bf16.mxu0 0
  %145 = vmatpush1.bf16.msra.mxu0 0
  %146 = vmatprep.subr.bf16.mxu0 0
  %147 = vmatpush1.bf16.msra.mxu0 0
  %148 = vmatprep.mubr.bf16.mxu0 0
  %149 = vmatmul.mubr.bf16.gmra.mrb[0].mxu0 %v114
  %v150 = vpop.f32.mrb[0].mxu0
  %v151 = vadd.f32 0.0, %v150
  %v152 = vpop.f32.mrb[0].mxu0
  %v153 = vpop.f32.mrb[0].mxu0
  %v154 = vadd.f32 0.0, %v153
  %v155 = vpop.f32.mrb[0].mxu0
  %156 = vdwg.mxu0
  %v161 = vunpack.c.l.b16 %v90
  %v162 = vunpack.c.l.b16 %v91
  %v163 = vunpack.c.l.b16 %v92
  %v164 = vunpack.c.l.b16 %v93
  %v165 = vpack.c.b16 %v162, %v161
  %v166 = vpack.c.b16 %v164, %v163
  %v170 = vsel %vm112, %v33, 0
  %172 = vmatprep.subr.bf16.mxu0 0
  %173 = vmatpush1.bf16.msra.mxu0 %v165
  %174 = vmatprep.subr.bf16.mxu0 0
  %175 = vmatpush1.bf16.msra.mxu0 %v166
  %176 = vmatprep.subr.bf16.mxu0 0
  %177 = vmatpush1.bf16.msra.mxu0 0
  %178 = vmatprep.subr.bf16.mxu0 0
  %179 = vmatpush1.bf16.msra.mxu0 0
  %180 = vmatprep.subr.bf16.mxu0 0
  %181 = vmatpush1.bf16.msra.mxu0 0
  %182 = vmatprep.subr.bf16.mxu0 0
  %183 = vmatpush1.bf16.msra.mxu0 0
  %184 = vmatprep.subr.bf16.mxu0 0
  %185 = vmatpush1.bf16.msra.mxu0 0
  %186 = vmatprep.subr.bf16.mxu0 0
  %187 = vmatpush1.bf16.msra.mxu0 0
  %188 = vmatprep.subr.bf16.mxu0 0
  %189 = vmatpush1.bf16.msra.mxu0 0
  %190 = vmatprep.subr.bf16.mxu0 0
  %191 = vmatpush1.bf16.msra.mxu0 0
  %192 = vmatprep.subr.bf16.mxu0 0
  %193 = vmatpush1.bf16.msra.mxu0 0
  %194 = vmatprep.subr.bf16.mxu0 0
  %195 = vmatpush1.bf16.msra.mxu0 0
  %196 = vmatprep.subr.bf16.mxu0 0
  %197 = vmatpush1.bf16.msra.mxu0 0
  %198 = vmatprep.subr.bf16.mxu0 0
  %199 = vmatpush1.bf16.msra.mxu0 0
  %200 = vmatprep.subr.bf16.mxu0 0
  %201 = vmatpush1.bf16.msra.mxu0 0
  %202 = vmatprep.subr.bf16.mxu0 0
  %203 = vmatpush1.bf16.msra.mxu0 0
  %204 = vmatprep.mubr.bf16.mxu0 0
  %205 = vmatmul.mubr.bf16.gmra.mrb[0].mxu0 %v170
  %v206 = vpop.f32.mrb[0].mxu0
  %v207 = vadd.f32 %v151, %v206
  %v208 = vpop.f32.mrb[0].mxu0
  %v209 = vpop.f32.mrb[0].mxu0
  %v210 = vadd.f32 %v154, %v209
  %v211 = vpop.f32.mrb[0].mxu0
  %212 = vdwg.mxu0
  %v213 = vpack.c.bf16 %v87, %v84
  %s214 = scalar_lea.vmem %s2, 32
  %v215 = vld [vmem:[%s214] sm:$0xf]
  %v216 = vld [vmem:[%s214 + $0x4] sm:$0xf]
  %v217 = vld [vmem:[%s214 + $0x8] sm:$0xf]
  %v218 = vld [vmem:[%s214 + $0xc] sm:$0xf]
  %v223 = vunpack.c.l.b16 %v215
  %v224 = vunpack.c.l.b16 %v216
  %v225 = vunpack.c.l.b16 %v217
  %v226 = vunpack.c.l.b16 %v218
  %v227 = vpack.c.b16 %v224, %v223
  %v228 = vpack.c.b16 %v226, %v225
  %v232 = vsel %vm112, %v213, 0
  %234 = vmatprep.subr.bf16.mxu0 0
  %235 = vmatpush1.bf16.msra.mxu0 %v227
  %236 = vmatprep.subr.bf16.mxu0 0
  %237 = vmatpush1.bf16.msra.mxu0 %v228
  %238 = vmatprep.subr.bf16.mxu0 0
  %239 = vmatpush1.bf16.msra.mxu0 0
  %240 = vmatprep.subr.bf16.mxu0 0
  %241 = vmatpush1.bf16.msra.mxu0 0
  %242 = vmatprep.subr.bf16.mxu0 0
  %243 = vmatpush1.bf16.msra.mxu0 0
  %244 = vmatprep.subr.bf16.mxu0 0
  %245 = vmatpush1.bf16.msra.mxu0 0
  %246 = vmatprep.subr.bf16.mxu0 0
  %247 = vmatpush1.bf16.msra.mxu0 0
  %248 = vmatprep.subr.bf16.mxu0 0
  %249 = vmatpush1.bf16.msra.mxu0 0
  %250 = vmatprep.subr.bf16.mxu0 0
  %251 = vmatpush1.bf16.msra.mxu0 0
  %252 = vmatprep.subr.bf16.mxu0 0
  %253 = vmatpush1.bf16.msra.mxu0 0
  %254 = vmatprep.subr.bf16.mxu0 0
  %255 = vmatpush1.bf16.msra.mxu0 0
  %256 = vmatprep.subr.bf16.mxu0 0
  %257 = vmatpush1.bf16.msra.mxu0 0
  %258 = vmatprep.subr.bf16.mxu0 0
  %259 = vmatpush1.bf16.msra.mxu0 0
  %260 = vmatprep.subr.bf16.mxu0 0
  %261 = vmatpush1.bf16.msra.mxu0 0
  %262 = vmatprep.subr.bf16.mxu0 0
  %263 = vmatpush1.bf16.msra.mxu0 0
  %264 = vmatprep.subr.bf16.mxu0 0
  %265 = vmatpush1.bf16.msra.mxu0 0
  %266 = vmatprep.mubr.bf16.mxu0 0
  %267 = vmatmul.mubr.bf16.gmra.mrb[0].mxu0 %v232
  %v268 = vpop.f32.mrb[0].mxu0
  %v269 = vadd.f32 0.0, %v268
  %v270 = vpop.f32.mrb[0].mxu0
  %v271 = vpop.f32.mrb[0].mxu0
  %v272 = vadd.f32 0.0, %v271
  %v273 = vpop.f32.mrb[0].mxu0
  %274 = vdwg.mxu0
  %v275 = vadd.f32 %v207, %v269
  %v276 = vadd.f32 %v210, %v272
  %v277 = vlaneseq
  %v278 = vshrl.u32 %v277, 7
  %v279 = vsub.s32 0, %v278
  %v280 = vrot.slane %v31, %v279
  %v281 = vadd.f32 %v275, %v280
  %v282 = vadd.f32 %v276, %v280
  %v283 = vsel %vm112, %v281, 0.0
  %284 = vadd.xlane.f32.xlu0 %v283
  %v285 = vpop.xlane.xlu0 %284
  %v286 = vsel %vm112, %v282, 0.0
  %287 = vadd.xlane.f32.xlu0 %v286
  %v288 = vpop.xlane.xlu0 %287
  %v289 = vmul.f32 %v281, %v281
  %v290 = vmul.f32 %v282, %v282
  %v291 = vsel %vm112, %v289, 0.0
  %292 = vadd.xlane.f32.xlu0 %v291
  %v293 = vpop.xlane.xlu0 %292
  %v294 = vsel %vm112, %v290, 0.0
  %295 = vadd.xlane.f32.xlu0 %v294
  %v296 = vpop.xlane.xlu0 %295
  %v297 = vmul.f32 %v285, 0.03125
  %v298 = vmul.f32 %v288, 0.03125
  %v299 = vmul.f32 %v293, 0.03125
  %v300 = vmul.f32 %v296, 0.03125
  %v301 = vmul.f32 %v297, %v297
  %v302 = vmul.f32 %v298, %v298
  %v303 = vsub.f32 %v299, %v301
  %v304 = vsub.f32 %v300, %v302
  %v305 = vsub.f32 %v281, %v297
  %v306 = vsub.f32 %v282, %v298
  %v307 = vadd.f32 %v303, 1e-05
  %v308 = vadd.f32 %v304, 1e-05
  %v309 = vrsqrt.pop %v307
  %v310 = vrsqrt.pop %v308
  %v311 = vmul.f32 %v305, %v309
  %v312 = vmul.f32 %v306, %v310
  %v313 = vlaneseq
  %v314 = vshrl.u32 %v313, 7
  %v315 = vsub.s32 1, %v314
  %v316 = vrot.slane %v31, %v315
  %v317 = vmul.f32 %v311, %v316
  %v318 = vmul.f32 %v312, %v316
  %v319 = vlaneseq
  %v320 = vshrl.u32 %v319, 7
  %v321 = vsub.s32 2, %v320
  %v322 = vrot.slane %v31, %v321
  %v323 = vadd.f32 %v317, %v322
  %v324 = vadd.f32 %v318, %v322
  %vm325 = vcmp.ge.f32.partialorder %v323, 0.0
  %vm326 = vcmp.ge.f32.partialorder %v324, 0.0
  %v327 = vmul.f32 %v323, 0.01
  %v328 = vmul.f32 %v324, 0.01
  %v329 = vsel %vm325, %v323, %v327
  %v330 = vsel %vm326, %v324, %v328
  %v331 = vadd.f32 %v15, %v329
  %v332 = vadd.f32 %v16, %v330
  %v333 = vpack.c.bf16 %v330, %v329
  %334 = vmatprep.subr.bf16.mxu0 0
  %335 = vmatpush1.bf16.msra.mxu0 %v333
  %336 = vmatprep.subr.bf16.mxu0 0
  %337 = vmatpush1.bf16.msra.mxu0 0
  %338 = vmatprep.subr.bf16.mxu0 0
  %339 = vmatpush1.bf16.msra.mxu0 0
  %340 = vmatprep.subr.bf16.mxu0 0
  %341 = vmatpush1.bf16.msra.mxu0 0
  %342 = vmatprep.subr.bf16.mxu0 0
  %343 = vmatpush1.bf16.msra.mxu0 0
  %344 = vmatprep.subr.bf16.mxu0 0
  %345 = vmatpush1.bf16.msra.mxu0 0
  %346 = vmatprep.subr.bf16.mxu0 0
  %347 = vmatpush1.bf16.msra.mxu0 0
  %348 = vmatprep.subr.bf16.mxu0 0
  %349 = vmatpush1.bf16.msra.mxu0 0
  %350 = vmatprep.subr.bf16.mxu0 0
  %351 = vmatpush1.bf16.msra.mxu0 0
  %352 = vmatprep.subr.bf16.mxu0 0
  %353 = vmatpush1.bf16.msra.mxu0 0
  %354 = vmatprep.subr.bf16.mxu0 0
  %355 = vmatpush1.bf16.msra.mxu0 0
  %356 = vmatprep.subr.bf16.mxu0 0
  %357 = vmatpush1.bf16.msra.mxu0 0
  %358 = vmatprep.subr.bf16.mxu0 0
  %359 = vmatpush1.bf16.msra.mxu0 0
  %360 = vmatprep.subr.bf16.mxu0 0
  %361 = vmatpush1.bf16.msra.mxu0 0
  %362 = vmatprep.subr.bf16.mxu0 0
  %363 = vmatpush1.bf16.msra.mxu0 0
  %364 = vmatprep.subr.bf16.mxu0 0
  %365 = vmatpush1.bf16.msra.mxu0 0
  %366 = vmatprep.mubr.bf16.mxu0 0
  %367 = vmatmul.mubr.bf16.gmra.mrb[0].mxu0 %v36
  %v368 = vpop.f32.mrb[0].mxu0
  %v369 = vadd.f32 0.0, %v368
  %v370 = vpop.f32.mrb[0].mxu0
  %v371 = vpop.f32.mrb[0].mxu0
  %v372 = vadd.f32 0.0, %v371
  %v373 = vpop.f32.mrb[0].mxu0
  %374 = vmatprep.mubr.bf16.mxu0 0
  %375 = vmatmul.mubr.bf16.gmra.mrb[0].mxu0 %v39
  %v376 = vpop.f32.mrb[0].mxu0
  %v377 = vadd.f32 0.0, %v376
  %v378 = vpop.f32.mrb[0].mxu0
  %v379 = vpop.f32.mrb[0].mxu0
  %v380 = vadd.f32 0.0, %v379
  %v381 = vpop.f32.mrb[0].mxu0
  %382 = vdwg.mxu0
  %v383 = vpack.c.bf16 %v332, %v331
  %s384 = scalar_lea.vmem %s2, 48
  %v385 = vld [vmem:[%s384] sm:$0xf]
  %v386 = vld [vmem:[%s384 + $0x4] sm:$0xf]
  %v387 = vld [vmem:[%s384 + $0x8] sm:$0xf]
  %v388 = vld [vmem:[%s384 + $0xc] sm:$0xf]
  %v389 = vpack.c.bf16 %v372, %v369
  %s390 = scalar_lea.vmem %s2, 64
  %v391 = vld [vmem:[%s390] sm:$0xf]
  %v392 = vld [vmem:[%s390 + $0x4] sm:$0xf]
  %v393 = vld [vmem:[%s390 + $0x8] sm:$0xf]
  %v394 = vld [vmem:[%s390 + $0xc] sm:$0xf]
  %v399 = vunpack.c.l.b16 %v391
  %v400 = vunpack.c.l.b16 %v392
  %v401 = vunpack.c.l.b16 %v393
  %v402 = vunpack.c.l.b16 %v394
  %v403 = vpack.c.b16 %v400, %v399
  %v404 = vpack.c.b16 %v402, %v401
  %v408 = vsel %vm112, %v389, 0
  %410 = vmatprep.subr.bf16.mxu0 0
  %411 = vmatpush1.bf16.msra.mxu0 %v403
  %412 = vmatprep.subr.bf16.mxu0 0
  %413 = vmatpush1.bf16.msra.mxu0 %v404
  %414 = vmatprep.subr.bf16.mxu0 0
  %415 = vmatpush1.bf16.msra.mxu0 0
  %416 = vmatprep.subr.bf16.mxu0 0
  %417 = vmatpush1.bf16.msra.mxu0 0
  %418 = vmatprep.subr.bf16.mxu0 0
  %419 = vmatpush1.bf16.msra.mxu0 0
  %420 = vmatprep.subr.bf16.mxu0 0
  %421 = vmatpush1.bf16.msra.mxu0 0
  %422 = vmatprep.subr.bf16.mxu0 0
  %423 = vmatpush1.bf16.msra.mxu0 0
  %424 = vmatprep.subr.bf16.mxu0 0
  %425 = vmatpush1.bf16.msra.mxu0 0
  %426 = vmatprep.subr.bf16.mxu0 0
  %427 = vmatpush1.bf16.msra.mxu0 0
  %428 = vmatprep.subr.bf16.mxu0 0
  %429 = vmatpush1.bf16.msra.mxu0 0
  %430 = vmatprep.subr.bf16.mxu0 0
  %431 = vmatpush1.bf16.msra.mxu0 0
  %432 = vmatprep.subr.bf16.mxu0 0
  %433 = vmatpush1.bf16.msra.mxu0 0
  %434 = vmatprep.subr.bf16.mxu0 0
  %435 = vmatpush1.bf16.msra.mxu0 0
  %436 = vmatprep.subr.bf16.mxu0 0
  %437 = vmatpush1.bf16.msra.mxu0 0
  %438 = vmatprep.subr.bf16.mxu0 0
  %439 = vmatpush1.bf16.msra.mxu0 0
  %440 = vmatprep.subr.bf16.mxu0 0
  %441 = vmatpush1.bf16.msra.mxu0 0
  %442 = vmatprep.mubr.bf16.mxu0 0
  %443 = vmatmul.mubr.bf16.gmra.mrb[0].mxu0 %v408
  %v444 = vpop.f32.mrb[0].mxu0
  %v445 = vadd.f32 0.0, %v444
  %v446 = vpop.f32.mrb[0].mxu0
  %v447 = vpop.f32.mrb[0].mxu0
  %v448 = vadd.f32 0.0, %v447
  %v449 = vpop.f32.mrb[0].mxu0
  %450 = vdwg.mxu0
  %v455 = vunpack.c.l.b16 %v385
  %v456 = vunpack.c.l.b16 %v386
  %v457 = vunpack.c.l.b16 %v387
  %v458 = vunpack.c.l.b16 %v388
  %v459 = vpack.c.b16 %v456, %v455
  %v460 = vpack.c.b16 %v458, %v457
  %v464 = vsel %vm112, %v383, 0
  %466 = vmatprep.subr.bf16.mxu0 0
  %467 = vmatpush1.bf16.msra.mxu0 %v459
  %468 = vmatprep.subr.bf16.mxu0 0
  %469 = vmatpush1.bf16.msra.mxu0 %v460
  %470 = vmatprep.subr.bf16.mxu0 0
  %471 = vmatpush1.bf16.msra.mxu0 0
  %472 = vmatprep.subr.bf16.mxu0 0
  %473 = vmatpush1.bf16.msra.mxu0 0
  %474 = vmatprep.subr.bf16.mxu0 0
  %475 = vmatpush1.bf16.msra.mxu0 0
  %476 = vmatprep.subr.bf16.mxu0 0
  %477 = vmatpush1.bf16.msra.mxu0 0
  %478 = vmatprep.subr.bf16.mxu0 0
  %479 = vmatpush1.bf16.msra.mxu0 0
  %480 = vmatprep.subr.bf16.mxu0 0
  %481 = vmatpush1.bf16.msra.mxu0 0
  %482 = vmatprep.subr.bf16.mxu0 0
  %483 = vmatpush1.bf16.msra.mxu0 0
  %484 = vmatprep.subr.bf16.mxu0 0
  %485 = vmatpush1.bf16.msra.mxu0 0
  %486 = vmatprep.subr.bf16.mxu0 0
  %487 = vmatpush1.bf16.msra.mxu0 0
  %488 = vmatprep.subr.bf16.mxu0 0
  %489 = vmatpush1.bf16.msra.mxu0 0
  %490 = vmatprep.subr.bf16.mxu0 0
  %491 = vmatpush1.bf16.msra.mxu0 0
  %492 = vmatprep.subr.bf16.mxu0 0
  %493 = vmatpush1.bf16.msra.mxu0 0
  %494 = vmatprep.subr.bf16.mxu0 0
  %495 = vmatpush1.bf16.msra.mxu0 0
  %496 = vmatprep.subr.bf16.mxu0 0
  %497 = vmatpush1.bf16.msra.mxu0 0
  %498 = vmatprep.mubr.bf16.mxu0 0
  %499 = vmatmul.mubr.bf16.gmra.mrb[0].mxu0 %v464
  %v500 = vpop.f32.mrb[0].mxu0
  %v501 = vadd.f32 %v445, %v500
  %v502 = vpop.f32.mrb[0].mxu0
  %v503 = vpop.f32.mrb[0].mxu0
  %v504 = vadd.f32 %v448, %v503
  %v505 = vpop.f32.mrb[0].mxu0
  %506 = vdwg.mxu0
  %v507 = vpack.c.bf16 %v380, %v377
  %s508 = scalar_lea.vmem %s2, 80
  %v509 = vld [vmem:[%s508] sm:$0xf]
  %v510 = vld [vmem:[%s508 + $0x4] sm:$0xf]
  %v511 = vld [vmem:[%s508 + $0x8] sm:$0xf]
  %v512 = vld [vmem:[%s508 + $0xc] sm:$0xf]
  %v517 = vunpack.c.l.b16 %v509
  %v518 = vunpack.c.l.b16 %v510
  %v519 = vunpack.c.l.b16 %v511
  %v520 = vunpack.c.l.b16 %v512
  %v521 = vpack.c.b16 %v518, %v517
  %v522 = vpack.c.b16 %v520, %v519
  %v526 = vsel %vm112, %v507, 0
  %528 = vmatprep.subr.bf16.mxu0 0
  %529 = vmatpush1.bf16.msra.mxu0 %v521
  %530 = vmatprep.subr.bf16.mxu0 0
  %531 = vmatpush1.bf16.msra.mxu0 %v522
  %532 = vmatprep.subr.bf16.mxu0 0
  %533 = vmatpush1.bf16.msra.mxu0 0
  %534 = vmatprep.subr.bf16.mxu0 0
  %535 = vmatpush1.bf16.msra.mxu0 0
  %536 = vmatprep.subr.bf16.mxu0 0
  %537 = vmatpush1.bf16.msra.mxu0 0
  %538 = vmatprep.subr.bf16.mxu0 0
  %539 = vmatpush1.bf16.msra.mxu0 0
  %540 = vmatprep.subr.bf16.mxu0 0
  %541 = vmatpush1.bf16.msra.mxu0 0
  %542 = vmatprep.subr.bf16.mxu0 0
  %543 = vmatpush1.bf16.msra.mxu0 0
  %544 = vmatprep.subr.bf16.mxu0 0
  %545 = vmatpush1.bf16.msra.mxu0 0
  %546 = vmatprep.subr.bf16.mxu0 0
  %547 = vmatpush1.bf16.msra.mxu0 0
  %548 = vmatprep.subr.bf16.mxu0 0
  %549 = vmatpush1.bf16.msra.mxu0 0
  %550 = vmatprep.subr.bf16.mxu0 0
  %551 = vmatpush1.bf16.msra.mxu0 0
  %552 = vmatprep.subr.bf16.mxu0 0
  %553 = vmatpush1.bf16.msra.mxu0 0
  %554 = vmatprep.subr.bf16.mxu0 0
  %555 = vmatpush1.bf16.msra.mxu0 0
  %556 = vmatprep.subr.bf16.mxu0 0
  %557 = vmatpush1.bf16.msra.mxu0 0
  %558 = vmatprep.subr.bf16.mxu0 0
  %559 = vmatpush1.bf16.msra.mxu0 0
  %560 = vmatprep.mubr.bf16.mxu0 0
  %561 = vmatmul.mubr.bf16.gmra.mrb[0].mxu0 %v526
  %v562 = vpop.f32.mrb[0].mxu0
  %v563 = vadd.f32 0.0, %v562
  %v564 = vpop.f32.mrb[0].mxu0
  %v565 = vpop.f32.mrb[0].mxu0
  %v566 = vadd.f32 0.0, %v565
  %v567 = vpop.f32.mrb[0].mxu0
  %568 = vdwg.mxu0
  %v569 = vadd.f32 %v501, %v563
  %v570 = vadd.f32 %v504, %v566
  %v571 = vlaneseq
  %v572 = vshrl.u32 %v571, 7
  %v573 = vsub.s32 3, %v572
  %v574 = vrot.slane %v31, %v573
  %v575 = vadd.f32 %v569, %v574
  %v576 = vadd.f32 %v570, %v574
  %v577 = vsel %vm112, %v575, 0.0
  %578 = vadd.xlane.f32.xlu0 %v577
  %v579 = vpop.xlane.xlu0 %578
  %v580 = vsel %vm112, %v576, 0.0
  %581 = vadd.xlane.f32.xlu0 %v580
  %v582 = vpop.xlane.xlu0 %581
  %v583 = vmul.f32 %v575, %v575
  %v584 = vmul.f32 %v576, %v576
  %v585 = vsel %vm112, %v583, 0.0
  %586 = vadd.xlane.f32.xlu0 %v585
  %v587 = vpop.xlane.xlu0 %586
  %v588 = vsel %vm112, %v584, 0.0
  %589 = vadd.xlane.f32.xlu0 %v588
  %v590 = vpop.xlane.xlu0 %589
  %v591 = vmul.f32 %v579, 0.03125
  %v592 = vmul.f32 %v582, 0.03125
  %v593 = vmul.f32 %v587, 0.03125
  %v594 = vmul.f32 %v590, 0.03125
  %v595 = vmul.f32 %v591, %v591
  %v596 = vmul.f32 %v592, %v592
  %v597 = vsub.f32 %v593, %v595
  %v598 = vsub.f32 %v594, %v596
  %v599 = vsub.f32 %v575, %v591
  %v600 = vsub.f32 %v576, %v592
  %v601 = vadd.f32 %v597, 1e-05
  %v602 = vadd.f32 %v598, 1e-05
  %v603 = vrsqrt.pop %v601
  %v604 = vrsqrt.pop %v602
  %v605 = vmul.f32 %v599, %v603
  %v606 = vmul.f32 %v600, %v604
  %v607 = vlaneseq
  %v608 = vshrl.u32 %v607, 7
  %v609 = vsub.s32 4, %v608
  %v610 = vrot.slane %v31, %v609
  %v611 = vmul.f32 %v605, %v610
  %v612 = vmul.f32 %v606, %v610
  %v613 = vlaneseq
  %v614 = vshrl.u32 %v613, 7
  %v615 = vsub.s32 5, %v614
  %v616 = vrot.slane %v31, %v615
  %v617 = vadd.f32 %v611, %v616
  %v618 = vadd.f32 %v612, %v616
  %vm619 = vcmp.ge.f32.partialorder %v617, 0.0
  %vm620 = vcmp.ge.f32.partialorder %v618, 0.0
  %v621 = vmul.f32 %v617, 0.01
  %v622 = vmul.f32 %v618, 0.01
  %v623 = vsel %vm619, %v617, %v621
  %v624 = vsel %vm620, %v618, %v622
  %v625 = vpack.c.bf16 %v624, %v623
  %s626 = scalar_lea.vmem %s2, 96
  %v627 = vld [vmem:[%s626] sm:$0xf]
  %v628 = vld [vmem:[%s626 + $0x4] sm:$0xf]
  %v629 = vld [vmem:[%s626 + $0x8] sm:$0xf]
  %v630 = vld [vmem:[%s626 + $0xc] sm:$0xf]
  %v631 = vlaneseq
  %v632 = vshrl.u32 %v631, 7
  %v633 = vsub.s32 6, %v632
  %v634 = vrot.slane %v31, %v633
  %v639 = vunpack.c.l.b16 %v627
  %v640 = vunpack.c.l.b16 %v628
  %v641 = vunpack.c.l.b16 %v629
  %v642 = vunpack.c.l.b16 %v630
  %v643 = vpack.c.b16 %v640, %v639
  %v644 = vpack.c.b16 %v642, %v641
  %v648 = vsel %vm112, %v625, 0
  %650 = vmatprep.subr.bf16.mxu0 0
  %651 = vmatpush1.bf16.msra.mxu0 %v643
  %652 = vmatprep.subr.bf16.mxu0 0
  %653 = vmatpush1.bf16.msra.mxu0 %v644
  %654 = vmatprep.subr.bf16.mxu0 0
  %655 = vmatpush1.bf16.msra.mxu0 0
  %656 = vmatprep.subr.bf16.mxu0 0
  %657 = vmatpush1.bf16.msra.mxu0 0
  %658 = vmatprep.subr.bf16.mxu0 0
  %659 = vmatpush1.bf16.msra.mxu0 0
  %660 = vmatprep.subr.bf16.mxu0 0
  %661 = vmatpush1.bf16.msra.mxu0 0
  %662 = vmatprep.subr.bf16.mxu0 0
  %663 = vmatpush1.bf16.msra.mxu0 0
  %664 = vmatprep.subr.bf16.mxu0 0
  %665 = vmatpush1.bf16.msra.mxu0 0
  %666 = vmatprep.subr.bf16.mxu0 0
  %667 = vmatpush1.bf16.msra.mxu0 0
  %668 = vmatprep.subr.bf16.mxu0 0
  %669 = vmatpush1.bf16.msra.mxu0 0
  %670 = vmatprep.subr.bf16.mxu0 0
  %671 = vmatpush1.bf16.msra.mxu0 0
  %672 = vmatprep.subr.bf16.mxu0 0
  %673 = vmatpush1.bf16.msra.mxu0 0
  %674 = vmatprep.subr.bf16.mxu0 0
  %675 = vmatpush1.bf16.msra.mxu0 0
  %676 = vmatprep.subr.bf16.mxu0 0
  %677 = vmatpush1.bf16.msra.mxu0 0
  %678 = vmatprep.subr.bf16.mxu0 0
  %679 = vmatpush1.bf16.msra.mxu0 0
  %680 = vmatprep.subr.bf16.mxu0 0
  %681 = vmatpush1.bf16.msra.mxu0 0
  %682 = vmatprep.mubr.bf16.mxu0 0
  %683 = vmatmul.mubr.bf16.gmra.mrb[0].mxu0 %v648
  %v684 = vpop.f32.mrb[0].mxu0
  %v685 = vadd.f32 %v634, %v684
  %v686 = vpop.f32.mrb[0].mxu0
  %v687 = vpop.f32.mrb[0].mxu0
  %v688 = vadd.f32 %v634, %v687
  %v689 = vpop.f32.mrb[0].mxu0
  %690 = vdwg.mxu0
  %s691 = scalar_lea.vmem %s2, 112
  %v692 = vld [vmem:[%s691] sm:$0xf]
  %v693 = vld [vmem:[%s691 + $0x4] sm:$0xf]
  %v694 = vld [vmem:[%s691 + $0x8] sm:$0xf]
  %v695 = vld [vmem:[%s691 + $0xc] sm:$0xf]
  %v696 = vlaneseq
  %v697 = vshrl.u32 %v696, 7
  %v698 = vsub.s32 7, %v697
  %v699 = vrot.slane %v31, %v698
  %v704 = vunpack.c.l.b16 %v692
  %v705 = vunpack.c.l.b16 %v693
  %v706 = vunpack.c.l.b16 %v694
  %v707 = vunpack.c.l.b16 %v695
  %v708 = vpack.c.b16 %v705, %v704
  %v709 = vpack.c.b16 %v707, %v706
  %712 = vmatprep.subr.bf16.mxu0 0
  %713 = vmatpush1.bf16.msra.mxu0 %v708
  %714 = vmatprep.subr.bf16.mxu0 0
  %715 = vmatpush1.bf16.msra.mxu0 %v709
  %716 = vmatprep.subr.bf16.mxu0 0
  %717 = vmatpush1.bf16.msra.mxu0 0
  %718 = vmatprep.subr.bf16.mxu0 0
  %719 = vmatpush1.bf16.msra.mxu0 0
  %720 = vmatprep.subr.bf16.mxu0 0
  %721 = vmatpush1.bf16.msra.mxu0 0
  %722 = vmatprep.subr.bf16.mxu0 0
  %723 = vmatpush1.bf16.msra.mxu0 0
  %724 = vmatprep.subr.bf16.mxu0 0
  %725 = vmatpush1.bf16.msra.mxu0 0
  %726 = vmatprep.subr.bf16.mxu0 0
  %727 = vmatpush1.bf16.msra.mxu0 0
  %728 = vmatprep.subr.bf16.mxu0 0
  %729 = vmatpush1.bf16.msra.mxu0 0
  %730 = vmatprep.subr.bf16.mxu0 0
  %731 = vmatpush1.bf16.msra.mxu0 0
  %732 = vmatprep.subr.bf16.mxu0 0
  %733 = vmatpush1.bf16.msra.mxu0 0
  %734 = vmatprep.subr.bf16.mxu0 0
  %735 = vmatpush1.bf16.msra.mxu0 0
  %736 = vmatprep.subr.bf16.mxu0 0
  %737 = vmatpush1.bf16.msra.mxu0 0
  %738 = vmatprep.subr.bf16.mxu0 0
  %739 = vmatpush1.bf16.msra.mxu0 0
  %740 = vmatprep.subr.bf16.mxu0 0
  %741 = vmatpush1.bf16.msra.mxu0 0
  %742 = vmatprep.subr.bf16.mxu0 0
  %743 = vmatpush1.bf16.msra.mxu0 0
  %744 = vmatprep.mubr.bf16.mxu0 0
  %745 = vmatmul.mubr.bf16.gmra.mrb[0].mxu0 %v648
  %v746 = vpop.f32.mrb[0].mxu0
  %v747 = vadd.f32 %v699, %v746
  %v748 = vpop.f32.mrb[0].mxu0
  %v749 = vpop.f32.mrb[0].mxu0
  %v750 = vadd.f32 %v699, %v749
  %v751 = vpop.f32.mrb[0].mxu0
  %752 = vdwg.mxu0
  %s753 = scalar_lea.vmem %s2, 128
  %v754 = vld [vmem:[%s753] sm:$0xf]
  %v755 = vld [vmem:[%s753 + $0x4] sm:$0xf]
  %v756 = vld [vmem:[%s753 + $0x8] sm:$0xf]
  %v757 = vld [vmem:[%s753 + $0xc] sm:$0xf]
  %v758 = vlaneseq
  %v759 = vshrl.u32 %v758, 7
  %v760 = vsub.s32 0, %v759
  %v761 = vrot.slane %v32, %v760
  %v766 = vunpack.c.l.b16 %v754
  %v767 = vunpack.c.l.b16 %v755
  %v768 = vunpack.c.l.b16 %v756
  %v769 = vunpack.c.l.b16 %v757
  %v770 = vpack.c.b16 %v767, %v766
  %v771 = vpack.c.b16 %v769, %v768
  %774 = vmatprep.subr.bf16.mxu0 0
  %775 = vmatpush1.bf16.msra.mxu0 %v770
  %776 = vmatprep.subr.bf16.mxu0 0
  %777 = vmatpush1.bf16.msra.mxu0 %v771
  %778 = vmatprep.subr.bf16.mxu0 0
  %779 = vmatpush1.bf16.msra.mxu0 0
  %780 = vmatprep.subr.bf16.mxu0 0
  %781 = vmatpush1.bf16.msra.mxu0 0
  %782 = vmatprep.subr.bf16.mxu0 0
  %783 = vmatpush1.bf16.msra.mxu0 0
  %784 = vmatprep.subr.bf16.mxu0 0
  %785 = vmatpush1.bf16.msra.mxu0 0
  %786 = vmatprep.subr.bf16.mxu0 0
  %787 = vmatpush1.bf16.msra.mxu0 0
  %788 = vmatprep.subr.bf16.mxu0 0
  %789 = vmatpush1.bf16.msra.mxu0 0
  %790 = vmatprep.subr.bf16.mxu0 0
  %791 = vmatpush1.bf16.msra.mxu0 0
  %792 = vmatprep.subr.bf16.mxu0 0
  %793 = vmatpush1.bf16.msra.mxu0 0
  %794 = vmatprep.subr.bf16.mxu0 0
  %795 = vmatpush1.bf16.msra.mxu0 0
  %796 = vmatprep.subr.bf16.mxu0 0
  %797 = vmatpush1.bf16.msra.mxu0 0
  %798 = vmatprep.subr.bf16.mxu0 0
  %799 = vmatpush1.bf16.msra.mxu0 0
  %800 = vmatprep.subr.bf16.mxu0 0
  %801 = vmatpush1.bf16.msra.mxu0 0
  %802 = vmatprep.subr.bf16.mxu0 0
  %803 = vmatpush1.bf16.msra.mxu0 0
  %804 = vmatprep.subr.bf16.mxu0 0
  %805 = vmatpush1.bf16.msra.mxu0 0
  %806 = vmatprep.mubr.bf16.mxu0 0
  %807 = vmatmul.mubr.bf16.gmra.mrb[0].mxu0 %v648
  %v808 = vpop.f32.mrb[0].mxu0
  %v809 = vadd.f32 %v761, %v808
  %v810 = vpop.f32.mrb[0].mxu0
  %v811 = vpop.f32.mrb[0].mxu0
  %v812 = vadd.f32 %v761, %v811
  %v813 = vpop.f32.mrb[0].mxu0
  %814 = vdwg.mxu0
  %v816 = vsel %vm34, %v21, 0
  %v819 = vsel %vm34, %v22, 0
  %821 = vmatprep.subr.mxu0 0.0
  %822 = vmatpush1.msra.mxu0 %v685
  %823 = vmatprep.subr.mxu0 0.0
  %824 = vmatpush1.msra.mxu0 %v688
  %825 = vmatprep.subr.mxu0 0.0
  %826 = vmatpush1.msra.mxu0 0.0
  %827 = vmatprep.subr.mxu0 0.0
  %828 = vmatpush1.msra.mxu0 0.0
  %829 = vmatprep.subr.mxu0 0.0
  %830 = vmatpush1.msra.mxu0 0.0
  %831 = vmatprep.subr.mxu0 0.0
  %832 = vmatpush1.msra.mxu0 0.0
  %833 = vmatprep.subr.mxu0 0.0
  %834 = vmatpush1.msra.mxu0 0.0
  %835 = vmatprep.subr.mxu0 0.0
  %836 = vmatpush1.msra.mxu0 0.0
  %837 = vmatprep.subr.mxu0 0.0
  %838 = vmatpush1.msra.mxu0 0.0
  %839 = vmatprep.subr.mxu0 0.0
  %840 = vmatpush1.msra.mxu0 0.0
  %841 = vmatprep.subr.mxu0 0.0
  %842 = vmatpush1.msra.mxu0 0.0
  %843 = vmatprep.subr.mxu0 0.0
  %844 = vmatpush1.msra.mxu0 0.0
  %845 = vmatprep.subr.mxu0 0.0
  %846 = vmatpush1.msra.mxu0 0.0
  %847 = vmatprep.subr.mxu0 0.0
  %848 = vmatpush1.msra.mxu0 0.0
  %849 = vmatprep.subr.mxu0 0.0
  %850 = vmatpush1.msra.mxu0 0.0
  %851 = vmatprep.subr.mxu0 0.0
  %852 = vmatpush1.msra.mxu0 0.0
  %853 = vmatprep.subr.mxu0 0.0
  %854 = vmatpush1.msra.mxu0 0.0
  %855 = vmatprep.subr.mxu0 0.0
  %856 = vmatpush1.msra.mxu0 0.0
  %857 = vmatprep.subr.mxu0 0.0
  %858 = vmatpush1.msra.mxu0 0.0
  %859 = vmatprep.subr.mxu0 0.0
  %860 = vmatpush1.msra.mxu0 0.0
  %861 = vmatprep.subr.mxu0 0.0
  %862 = vmatpush1.msra.mxu0 0.0
  %863 = vmatprep.subr.mxu0 0.0
  %864 = vmatpush1.msra.mxu0 0.0
  %865 = vmatprep.subr.mxu0 0.0
  %866 = vmatpush1.msra.mxu0 0.0
  %867 = vmatprep.subr.mxu0 0.0
  %868 = vmatpush1.msra.mxu0 0.0
  %869 = vmatprep.subr.mxu0 0.0
  %870 = vmatpush1.msra.mxu0 0.0
  %871 = vmatprep.subr.mxu0 0.0
  %872 = vmatpush1.msra.mxu0 0.0
  %873 = vmatprep.subr.mxu0 0.0
  %874 = vmatpush1.msra.mxu0 0.0
  %875 = vmatprep.subr.mxu0 0.0
  %876 = vmatpush1.msra.mxu0 0.0
  %877 = vmatprep.subr.mxu0 0.0
  %878 = vmatpush1.msra.mxu0 0.0
  %879 = vmatprep.subr.mxu0 0.0
  %880 = vmatpush1.msra.mxu0 0.0
  %881 = vmatprep.subr.mxu0 0.0
  %882 = vmatpush1.msra.mxu0 0.0
  %883 = vmatprep.subr.mxu0 0.0
  %884 = vmatpush1.msra.mxu0 0.0
  %885 = vmatprep.mubr.f32.mxu0 0.0
  %886 = vmatmul.mubr.f32.gmra.mrb[0].mxu0 %v816
  %v887 = vpop.f32.mrb[0].mxu0
  %v888 = vadd.f32 0.0, %v887
  %v889 = vpop.f32.mrb[0].mxu0
  %890 = vmatprep.mubr.f32.mxu0 0.0
  %891 = vmatmul.mubr.f32.gmra.mrb[0].mxu0 %v819
  %v892 = vpop.f32.mrb[0].mxu0
  %v893 = vadd.f32 0.0, %v892
  %v894 = vpop.f32.mrb[0].mxu0
  %895 = vdwg.mxu0
  %v896 = vmul.f32 %v888, %v747
  %v897 = vmul.f32 %v893, %v750
  %v898 = vsel %vm112, %v896, 0.0
  %899 = vadd.xlane.f32.xlu0 %v898
  %v900 = vpop.xlane.xlu0 %899
  %v901 = vsel %vm112, %v897, 0.0
  %902 = vadd.xlane.f32.xlu0 %v901
  %v903 = vpop.xlane.xlu0 %902
  %v904 = vlaneseq
  %v905 = vshrl.u32 %v904, 7
  %v906 = vadd.s32 %v905, 8
  %vm907 = vcmp.lt.s32.totalorder %v905, 0
  %v908 = vsub.s32 0, %v905
  %v909 = vsel %vm907, %v908, %v905
  %v910 = vshrl.u32 %v909, 3
  %v911 = vand.u32 %v909, 7
  %v912 = vsub.s32 0, %v911
  %v913 = vsel %vm907, %v912, %v911
  %vm914 = vcmp.lt.s32.totalorder %v906, 0
  %v915 = vsub.s32 0, %v906
  %v916 = vsel %vm914, %v915, %v906
  %v917 = vshrl.u32 %v916, 3
  %v918 = vand.u32 %v916, 7
  %v919 = vsub.s32 0, %v918
  %v920 = vsel %vm914, %v919, %v918
  %vm921 = vcmp.ne.s32.totalorder %v913, 0
  %vm922 = vcmp.ne.s32.totalorder %v920, 0
  %vm923 = vcmp.lt.s32.totalorder %v913, 0
  %vm924 = vcmp.lt.s32.totalorder %v920, 0
  %vm925 = vmand %vm923, %vm921
  %vm926 = vmand %vm924, %vm922
  %v927 = vadd.s32 %v913, 8
  %v928 = vadd.s32 %v920, 8
  %v929 = vsel %vm925, %v927, %v913
  %v930 = vsel %vm926, %v928, %v920
  %vm931 = vcmp.eq.s32.totalorder %v929, 0
  %vm932 = vcmp.eq.s32.totalorder %v930, 0
  %v933 = vsel %vm931, -1e+30, %v900
  %v934 = vsel %vm932, -1e+30, %v903
  %v935 = vmax.f32 %v933, %v934
  %v936 = vrot.slane %v935, 4
  %v937 = vmax.f32 %v935, %v936
  %v938 = vrot.slane %v937, 2
  %v939 = vmax.f32 %v937, %v938
  %v940 = vrot.slane %v939, 1
  %v941 = vmax.f32 %v939, %v940
  %s942 = vtos %v941
  %v943 = vstv %s942
  %v944 = vsub.f32 %v933, %v943
  %v945 = vsub.f32 %v934, %v943
  %v946 = vmul.f32 %v944, 1.442695
  %v947 = vpow.pop %v946
  %v948 = vmul.f32 %v945, 1.442695
  %v949 = vpow.pop %v948
  %v950 = vmul.f32 %v947, %v809
  %v951 = vmul.f32 %v949, %v812
  %v953 = vsel %vm34, %v24, 0
  %955 = vmatprep.subr.mxu0 0.0
  %956 = vmatpush1.msra.mxu0 %v947
  %957 = vmatprep.subr.mxu0 0.0
  %958 = vmatpush1.msra.mxu0 %v949
  %959 = vmatprep.subr.mxu0 0.0
  %960 = vmatpush1.msra.mxu0 0.0
  %961 = vmatprep.subr.mxu0 0.0
  %962 = vmatpush1.msra.mxu0 0.0
  %963 = vmatprep.subr.mxu0 0.0
  %964 = vmatpush1.msra.mxu0 0.0
  %965 = vmatprep.subr.mxu0 0.0
  %966 = vmatpush1.msra.mxu0 0.0
  %967 = vmatprep.subr.mxu0 0.0
  %968 = vmatpush1.msra.mxu0 0.0
  %969 = vmatprep.subr.mxu0 0.0
  %970 = vmatpush1.msra.mxu0 0.0
  %971 = vmatprep.subr.mxu0 0.0
  %972 = vmatpush1.msra.mxu0 0.0
  %973 = vmatprep.subr.mxu0 0.0
  %974 = vmatpush1.msra.mxu0 0.0
  %975 = vmatprep.subr.mxu0 0.0
  %976 = vmatpush1.msra.mxu0 0.0
  %977 = vmatprep.subr.mxu0 0.0
  %978 = vmatpush1.msra.mxu0 0.0
  %979 = vmatprep.subr.mxu0 0.0
  %980 = vmatpush1.msra.mxu0 0.0
  %981 = vmatprep.subr.mxu0 0.0
  %982 = vmatpush1.msra.mxu0 0.0
  %983 = vmatprep.subr.mxu0 0.0
  %984 = vmatpush1.msra.mxu0 0.0
  %985 = vmatprep.subr.mxu0 0.0
  %986 = vmatpush1.msra.mxu0 0.0
  %987 = vmatprep.subr.mxu0 0.0
  %988 = vmatpush1.msra.mxu0 0.0
  %989 = vmatprep.subr.mxu0 0.0
  %990 = vmatpush1.msra.mxu0 0.0
  %991 = vmatprep.subr.mxu0 0.0
  %992 = vmatpush1.msra.mxu0 0.0
  %993 = vmatprep.subr.mxu0 0.0
  %994 = vmatpush1.msra.mxu0 0.0
  %995 = vmatprep.subr.mxu0 0.0
  %996 = vmatpush1.msra.mxu0 0.0
  %997 = vmatprep.subr.mxu0 0.0
  %998 = vmatpush1.msra.mxu0 0.0
  %999 = vmatprep.subr.mxu0 0.0
  %1000 = vmatpush1.msra.mxu0 0.0
  %1001 = vmatprep.subr.mxu0 0.0
  %1002 = vmatpush1.msra.mxu0 0.0
  %1003 = vmatprep.subr.mxu0 0.0
  %1004 = vmatpush1.msra.mxu0 0.0
  %1005 = vmatprep.subr.mxu0 0.0
  %1006 = vmatpush1.msra.mxu0 0.0
  %1007 = vmatprep.subr.mxu0 0.0
  %1008 = vmatpush1.msra.mxu0 0.0
  %1009 = vmatprep.subr.mxu0 0.0
  %1010 = vmatpush1.msra.mxu0 0.0
  %1011 = vmatprep.subr.mxu0 0.0
  %1012 = vmatpush1.msra.mxu0 0.0
  %1013 = vmatprep.subr.mxu0 0.0
  %1014 = vmatpush1.msra.mxu0 0.0
  %1015 = vmatprep.subr.mxu0 0.0
  %1016 = vmatpush1.msra.mxu0 0.0
  %1017 = vmatprep.subr.mxu0 0.0
  %1018 = vmatpush1.msra.mxu0 0.0
  %1019 = vmatprep.mubr.f32.mxu0 0.0
  %1020 = vmatmul.mubr.f32.gmra.mrb[0].mxu0 %v953
  %v1021 = vpop.f32.mrb[0].mxu0
  %v1022 = vadd.f32 0.0, %v1021
  %v1023 = vpop.f32.mrb[0].mxu0
  %1024 = vdwg.mxu0
  %v1026 = vsel %vm34, %v25, 0
  %1028 = vmatprep.subr.mxu0 0.0
  %1029 = vmatpush1.msra.mxu0 %v950
  %1030 = vmatprep.subr.mxu0 0.0
  %1031 = vmatpush1.msra.mxu0 %v951
  %1032 = vmatprep.subr.mxu0 0.0
  %1033 = vmatpush1.msra.mxu0 0.0
  %1034 = vmatprep.subr.mxu0 0.0
  %1035 = vmatpush1.msra.mxu0 0.0
  %1036 = vmatprep.subr.mxu0 0.0
  %1037 = vmatpush1.msra.mxu0 0.0
  %1038 = vmatprep.subr.mxu0 0.0
  %1039 = vmatpush1.msra.mxu0 0.0
  %1040 = vmatprep.subr.mxu0 0.0
  %1041 = vmatpush1.msra.mxu0 0.0
  %1042 = vmatprep.subr.mxu0 0.0
  %1043 = vmatpush1.msra.mxu0 0.0
  %1044 = vmatprep.subr.mxu0 0.0
  %1045 = vmatpush1.msra.mxu0 0.0
  %1046 = vmatprep.subr.mxu0 0.0
  %1047 = vmatpush1.msra.mxu0 0.0
  %1048 = vmatprep.subr.mxu0 0.0
  %1049 = vmatpush1.msra.mxu0 0.0
  %1050 = vmatprep.subr.mxu0 0.0
  %1051 = vmatpush1.msra.mxu0 0.0
  %1052 = vmatprep.subr.mxu0 0.0
  %1053 = vmatpush1.msra.mxu0 0.0
  %1054 = vmatprep.subr.mxu0 0.0
  %1055 = vmatpush1.msra.mxu0 0.0
  %1056 = vmatprep.subr.mxu0 0.0
  %1057 = vmatpush1.msra.mxu0 0.0
  %1058 = vmatprep.subr.mxu0 0.0
  %1059 = vmatpush1.msra.mxu0 0.0
  %1060 = vmatprep.subr.mxu0 0.0
  %1061 = vmatpush1.msra.mxu0 0.0
  %1062 = vmatprep.subr.mxu0 0.0
  %1063 = vmatpush1.msra.mxu0 0.0
  %1064 = vmatprep.subr.mxu0 0.0
  %1065 = vmatpush1.msra.mxu0 0.0
  %1066 = vmatprep.subr.mxu0 0.0
  %1067 = vmatpush1.msra.mxu0 0.0
  %1068 = vmatprep.subr.mxu0 0.0
  %1069 = vmatpush1.msra.mxu0 0.0
  %1070 = vmatprep.subr.mxu0 0.0
  %1071 = vmatpush1.msra.mxu0 0.0
  %1072 = vmatprep.subr.mxu0 0.0
  %1073 = vmatpush1.msra.mxu0 0.0
  %1074 = vmatprep.subr.mxu0 0.0
  %1075 = vmatpush1.msra.mxu0 0.0
  %1076 = vmatprep.subr.mxu0 0.0
  %1077 = vmatpush1.msra.mxu0 0.0
  %1078 = vmatprep.subr.mxu0 0.0
  %1079 = vmatpush1.msra.mxu0 0.0
  %1080 = vmatprep.subr.mxu0 0.0
  %1081 = vmatpush1.msra.mxu0 0.0
  %1082 = vmatprep.subr.mxu0 0.0
  %1083 = vmatpush1.msra.mxu0 0.0
  %1084 = vmatprep.subr.mxu0 0.0
  %1085 = vmatpush1.msra.mxu0 0.0
  %1086 = vmatprep.subr.mxu0 0.0
  %1087 = vmatpush1.msra.mxu0 0.0
  %1088 = vmatprep.subr.mxu0 0.0
  %1089 = vmatpush1.msra.mxu0 0.0
  %1090 = vmatprep.subr.mxu0 0.0
  %1091 = vmatpush1.msra.mxu0 0.0
  %1092 = vmatprep.mubr.f32.mxu0 0.0
  %1093 = vmatmul.mubr.f32.gmra.mrb[0].mxu0 %v1026
  %v1094 = vpop.f32.mrb[0].mxu0
  %v1095 = vadd.f32 0.0, %v1094
  %v1096 = vpop.f32.mrb[0].mxu0
  %1097 = vdwg.mxu0
  %v1098 = vrcp.pop %v1022
  %v1099 = vmul.f32 %v1095, %v1098
  %v1101 = vsel %vm34, %v23, 0
  %1103 = vmatprep.subr.mxu0 0.0
  %1104 = vmatpush1.msra.mxu0 %v623
  %1105 = vmatprep.subr.mxu0 0.0
  %1106 = vmatpush1.msra.mxu0 %v624
  %1107 = vmatprep.subr.mxu0 0.0
  %1108 = vmatpush1.msra.mxu0 0.0
  %1109 = vmatprep.subr.mxu0 0.0
  %1110 = vmatpush1.msra.mxu0 0.0
  %1111 = vmatprep.subr.mxu0 0.0
  %1112 = vmatpush1.msra.mxu0 0.0
  %1113 = vmatprep.subr.mxu0 0.0
  %1114 = vmatpush1.msra.mxu0 0.0
  %1115 = vmatprep.subr.mxu0 0.0
  %1116 = vmatpush1.msra.mxu0 0.0
  %1117 = vmatprep.subr.mxu0 0.0
  %1118 = vmatpush1.msra.mxu0 0.0
  %1119 = vmatprep.subr.mxu0 0.0
  %1120 = vmatpush1.msra.mxu0 0.0
  %1121 = vmatprep.subr.mxu0 0.0
  %1122 = vmatpush1.msra.mxu0 0.0
  %1123 = vmatprep.subr.mxu0 0.0
  %1124 = vmatpush1.msra.mxu0 0.0
  %1125 = vmatprep.subr.mxu0 0.0
  %1126 = vmatpush1.msra.mxu0 0.0
  %1127 = vmatprep.subr.mxu0 0.0
  %1128 = vmatpush1.msra.mxu0 0.0
  %1129 = vmatprep.subr.mxu0 0.0
  %1130 = vmatpush1.msra.mxu0 0.0
  %1131 = vmatprep.subr.mxu0 0.0
  %1132 = vmatpush1.msra.mxu0 0.0
  %1133 = vmatprep.subr.mxu0 0.0
  %1134 = vmatpush1.msra.mxu0 0.0
  %1135 = vmatprep.subr.mxu0 0.0
  %1136 = vmatpush1.msra.mxu0 0.0
  %1137 = vmatprep.subr.mxu0 0.0
  %1138 = vmatpush1.msra.mxu0 0.0
  %1139 = vmatprep.subr.mxu0 0.0
  %1140 = vmatpush1.msra.mxu0 0.0
  %1141 = vmatprep.subr.mxu0 0.0
  %1142 = vmatpush1.msra.mxu0 0.0
  %1143 = vmatprep.subr.mxu0 0.0
  %1144 = vmatpush1.msra.mxu0 0.0
  %1145 = vmatprep.subr.mxu0 0.0
  %1146 = vmatpush1.msra.mxu0 0.0
  %1147 = vmatprep.subr.mxu0 0.0
  %1148 = vmatpush1.msra.mxu0 0.0
  %1149 = vmatprep.subr.mxu0 0.0
  %1150 = vmatpush1.msra.mxu0 0.0
  %1151 = vmatprep.subr.mxu0 0.0
  %1152 = vmatpush1.msra.mxu0 0.0
  %1153 = vmatprep.subr.mxu0 0.0
  %1154 = vmatpush1.msra.mxu0 0.0
  %1155 = vmatprep.subr.mxu0 0.0
  %1156 = vmatpush1.msra.mxu0 0.0
  %1157 = vmatprep.subr.mxu0 0.0
  %1158 = vmatpush1.msra.mxu0 0.0
  %1159 = vmatprep.subr.mxu0 0.0
  %1160 = vmatpush1.msra.mxu0 0.0
  %1161 = vmatprep.subr.mxu0 0.0
  %1162 = vmatpush1.msra.mxu0 0.0
  %1163 = vmatprep.subr.mxu0 0.0
  %1164 = vmatpush1.msra.mxu0 0.0
  %1165 = vmatprep.subr.mxu0 0.0
  %1166 = vmatpush1.msra.mxu0 0.0
  %1167 = vmatprep.mubr.f32.mxu0 0.0
  %1168 = vmatmul.mubr.f32.gmra.mrb[0].mxu0 %v1101
  %v1169 = vpop.f32.mrb[0].mxu0
  %v1170 = vadd.f32 %v1099, %v1169
  %v1171 = vpop.f32.mrb[0].mxu0
  %1172 = vdwg.mxu0
  %v1173 = vadd.s32 %v905, 16
  %v1174 = vadd.s32 %v905, 24
  %v1175 = vlaneseq
  %v1176 = vand.u32 %v1175, 127
  %vm1177 = vcmp.eq.s32.totalorder %v905, %v1176
  %vm1178 = vcmp.eq.s32.totalorder %v906, %v1176
  %vm1179 = vcmp.eq.s32.totalorder %v1173, %v1176
  %vm1180 = vcmp.eq.s32.totalorder %v1174, %v1176
  %v1181 = vsel %vm1177, 1, 0
  %v1182 = vsel %vm1178, 1, 0
  %v1183 = vsel %vm1179, 1, 0
  %v1184 = vsel %vm1180, 1, 0
  %v1185 = vcvt.s32.f32 %v1181
  %v1186 = vcvt.s32.f32 %v1182
  %v1187 = vcvt.s32.f32 %v1183
  %v1188 = vcvt.s32.f32 %v1184
  %v1190 = vsel %vm112, %v1170, 0
  %1192 = vmatprep.subr.mxu0 0.0
  %1193 = vmatpush1.msra.mxu0 %v1185
  %1194 = vmatprep.subr.mxu0 0.0
  %1195 = vmatpush1.msra.mxu0 %v1186
  %1196 = vmatprep.subr.mxu0 0.0
  %1197 = vmatpush1.msra.mxu0 %v1187
  %1198 = vmatprep.subr.mxu0 0.0
  %1199 = vmatpush1.msra.mxu0 %v1188
  %1200 = vmatprep.subr.mxu0 0.0
  %1201 = vmatpush1.msra.mxu0 0.0
  %1202 = vmatprep.subr.mxu0 0.0
  %1203 = vmatpush1.msra.mxu0 0.0
  %1204 = vmatprep.subr.mxu0 0.0
  %1205 = vmatpush1.msra.mxu0 0.0
  %1206 = vmatprep.subr.mxu0 0.0
  %1207 = vmatpush1.msra.mxu0 0.0
  %1208 = vmatprep.subr.mxu0 0.0
  %1209 = vmatpush1.msra.mxu0 0.0
  %1210 = vmatprep.subr.mxu0 0.0
  %1211 = vmatpush1.msra.mxu0 0.0
  %1212 = vmatprep.subr.mxu0 0.0
  %1213 = vmatpush1.msra.mxu0 0.0
  %1214 = vmatprep.subr.mxu0 0.0
  %1215 = vmatpush1.msra.mxu0 0.0
  %1216 = vmatprep.subr.mxu0 0.0
  %1217 = vmatpush1.msra.mxu0 0.0
  %1218 = vmatprep.subr.mxu0 0.0
  %1219 = vmatpush1.msra.mxu0 0.0
  %1220 = vmatprep.subr.mxu0 0.0
  %1221 = vmatpush1.msra.mxu0 0.0
  %1222 = vmatprep.subr.mxu0 0.0
  %1223 = vmatpush1.msra.mxu0 0.0
  %1224 = vmatprep.subr.mxu0 0.0
  %1225 = vmatpush1.msra.mxu0 0.0
  %1226 = vmatprep.subr.mxu0 0.0
  %1227 = vmatpush1.msra.mxu0 0.0
  %1228 = vmatprep.subr.mxu0 0.0
  %1229 = vmatpush1.msra.mxu0 0.0
  %1230 = vmatprep.subr.mxu0 0.0
  %1231 = vmatpush1.msra.mxu0 0.0
  %1232 = vmatprep.subr.mxu0 0.0
  %1233 = vmatpush1.msra.mxu0 0.0
  %1234 = vmatprep.subr.mxu0 0.0
  %1235 = vmatpush1.msra.mxu0 0.0
  %1236 = vmatprep.subr.mxu0 0.0
  %1237 = vmatpush1.msra.mxu0 0.0
  %1238 = vmatprep.subr.mxu0 0.0
  %1239 = vmatpush1.msra.mxu0 0.0
  %1240 = vmatprep.subr.mxu0 0.0
  %1241 = vmatpush1.msra.mxu0 0.0
  %1242 = vmatprep.subr.mxu0 0.0
  %1243 = vmatpush1.msra.mxu0 0.0
  %1244 = vmatprep.subr.mxu0 0.0
  %1245 = vmatpush1.msra.mxu0 0.0
  %1246 = vmatprep.subr.mxu0 0.0
  %1247 = vmatpush1.msra.mxu0 0.0
  %1248 = vmatprep.subr.mxu0 0.0
  %1249 = vmatpush1.msra.mxu0 0.0
  %1250 = vmatprep.subr.mxu0 0.0
  %1251 = vmatpush1.msra.mxu0 0.0
  %1252 = vmatprep.subr.mxu0 0.0
  %1253 = vmatpush1.msra.mxu0 0.0
  %1254 = vmatprep.subr.mxu0 0.0
  %1255 = vmatpush1.msra.mxu0 0.0
  %1256 = vmatprep.mubr.f32.mxu0 0.0
  %1257 = vmatmul.mubr.f32.gmra.mrb[0].mxu0 %v1190
  %v1258 = vpop.f32.mrb[0].mxu0
  %v1259 = vadd.f32 0.0, %v1258
  %v1260 = vpop.f32.mrb[0].mxu0
  %1261 = vdwg.mxu0
  %1262 = vst [vmem:[%s3] sm:$0xff] %v1259
  // Predicated region
  $region14: #{tbcnn_forward_pallas.1} parent=0 // pred_check
    _
  $region15: #{tbcnn_forward_pallas.1} parent=0 // pred_check_branch
    %1264 = sbr.rel (0) target = $region17
  $region16: #{tbcnn_forward_pallas.1} parent=0 // pred_region
    _
  $region17: #{tbcnn_forward_pallas.1} parent=0 // pred_fallthru
    _
  // Predicated region
  $region18: #{tbcnn_forward_pallas.1} parent=0 // pred_check
    _
  $region19: #{tbcnn_forward_pallas.1} parent=0 // pred_check_branch
    %1266 = sbr.rel (0) target = $region21
  $region20: #{tbcnn_forward_pallas.1} parent=0 // pred_region
    _
  $region21: #{tbcnn_forward_pallas.1} parent=0 // pred_fallthru
    _

</llo_original>
